<compile_context>
chip_gen: v6e
topology: v6e:2x2x1
jax: 0.10.0
libtpu: 0.0.40
codegen_flags: <defaults>
</compile_context>

<pallas_src>
import math
from functools import partial

import jax
import jax.numpy as jnp
from jax.experimental import pallas as pl
from jax.experimental.pallas import tpu as pltpu


# ----------------------------------------------------------------------------- #
# Tiling / VMEM helpers
# ----------------------------------------------------------------------------- #
def _pick_tile(n, candidates):
    for t in candidates:
        if t <= n and n % t == 0:
            return t
    return n


def _pick_s_tile(s):
    return _pick_tile(s, (256, 128, 64, 32, 16, 8))


def _pick_kv_tile(s):
    return _pick_tile(s, (512, 256, 128, 64, 32, 16, 8))


def _pick_f_tile(f):
    for t in (512, 384, 256, 128):
        if t < f and f % t == 0:
            return t
    return f


_VMEM_LIMIT = None


def _vmem_limit():
    """~3/4 of detected physical VMEM, capped at 96 MiB (96 MiB v5e/v6e, 48 MiB v7x)."""
    global _VMEM_LIMIT
    if _VMEM_LIMIT is None:
        try:
            cap = int(pltpu.get_tpu_info().vmem_capacity_bytes)
        except Exception:
            cap = 128 * 1024 * 1024
        _VMEM_LIMIT = min((cap * 3) // 4, 96 * 1024 * 1024)
    return _VMEM_LIMIT


def _const_spec(shape):
    nd = len(shape)
    return pl.BlockSpec(shape, lambda *_, _nd=nd: (0,) * _nd)


# ----------------------------------------------------------------------------- #
# Kernel 1: QKV projection -> head-major q/k/v (bf16), no in-kernel transpose
# ----------------------------------------------------------------------------- #
def _qkv_proj_kernel(x_ref, wqkv_ref, bqkv_ref, q_ref, k_ref, v_ref, *, d_model, nhead):
    D, H = d_model, nhead
    hd = D // H
    x = x_ref[0]                                                       # (ts, D) f32
    qkv = jnp.dot(x.astype(jnp.bfloat16), wqkv_ref[...],
                  preferred_element_type=jnp.float32) + bqkv_ref[...]  # (ts, 3D) f32
    # static per-head column slices -> head-major stores (no S<->H relayout)
    for h in range(H):
        q_ref[0, h] = qkv[:, 0 * D + h * hd:0 * D + (h + 1) * hd].astype(q_ref.dtype)
        k_ref[0, h] = qkv[:, 1 * D + h * hd:1 * D + (h + 1) * hd].astype(k_ref.dtype)
        v_ref[0, h] = qkv[:, 2 * D + h * hd:2 * D + (h + 1) * hd].astype(v_ref.dtype)


def _qkv_projection(x, lp, *, nhead, ts):
    B, S, D = x.shape
    hd = D // nhead
    out = jax.ShapeDtypeStruct((B, nhead, S, hd), jnp.bfloat16)
    kernel = partial(_qkv_proj_kernel, d_model=D, nhead=nhead)
    return pl.pallas_call(
        kernel,
        grid=(B, S // ts),
        in_specs=[
            pl.BlockSpec((1, ts, D), lambda b, si: (b, si, 0)),
            _const_spec(lp["wqkv_t"].shape),
            _const_spec(lp["bqkv"].shape),
        ],
        out_specs=(
            pl.BlockSpec((1, nhead, ts, hd), lambda b, si: (b, 0, si, 0)),
            pl.BlockSpec((1, nhead, ts, hd), lambda b, si: (b, 0, si, 0)),
            pl.BlockSpec((1, nhead, ts, hd), lambda b, si: (b, 0, si, 0)),
        ),
        out_shape=(out, out, out),
        compiler_params=pltpu.CompilerParams(
            dimension_semantics=("parallel", "parallel"),
            vmem_limit_bytes=_vmem_limit(),
        ),
    )(x, lp["wqkv_t"], lp["bqkv"])


# ----------------------------------------------------------------------------- #
# Kernel 2: flash attention (online softmax over kv tiles)
# ----------------------------------------------------------------------------- #
def _flash_attn_kernel(q_ref, k_ref, v_ref, o_ref, m_sc, l_sc, acc_sc):
    f32 = jnp.float32
    ki = pl.program_id(3)

    @pl.when(ki == 0)
    def _():
        m_sc[...] = jnp.full_like(m_sc, -jnp.inf)
        l_sc[...] = jnp.zeros_like(l_sc)
        acc_sc[...] = jnp.zeros_like(acc_sc)

    q = q_ref[0, 0]                                                    # (tq, hd) bf16 (pre-scaled)
    k = k_ref[0, 0]                                                    # (tk, hd) bf16
    # s = q @ k^T, contraction over hd (no explicit transpose materialized)
    s = jax.lax.dot_general(q, k, (((1,), (1,)), ((), ())),
                            preferred_element_type=f32)                # (tq, tk) f32

    m_prev = m_sc[...]
    m_new = jnp.maximum(m_prev, jnp.max(s, axis=-1, keepdims=True))
    alpha = jnp.exp(m_prev - m_new)                                    # exp(-inf)=0 on first step
    p = jnp.exp(s - m_new)
    l_sc[...] = alpha * l_sc[...] + jnp.sum(p, axis=-1, keepdims=True)
    acc_sc[...] = alpha * acc_sc[...] + jnp.dot(p.astype(v_ref.dtype), v_ref[0, 0],
                                                preferred_element_type=f32)
    m_sc[...] = m_new

    @pl.when(ki == pl.num_programs(3) - 1)
    def _():
        # exact normalization (runs once per q tile; negligible cost)
        o_ref[0, 0] = (acc_sc[...] / l_sc[...]).astype(o_ref.dtype)


def _flash_attention(q, k, v, *, tq, tk):
    B, H, S, hd = q.shape
    return pl.pallas_call(
        _flash_attn_kernel,
        grid=(B, H, S // tq, S // tk),
        in_specs=[
            pl.BlockSpec((1, 1, tq, hd), lambda b, h, qi, ki: (b, h, qi, 0)),
            pl.BlockSpec((1, 1, tk, hd), lambda b, h, qi, ki: (b, h, ki, 0)),
            pl.BlockSpec((1, 1, tk, hd), lambda b, h, qi, ki: (b, h, ki, 0)),
        ],
        out_specs=pl.BlockSpec((1, 1, tq, hd), lambda b, h, qi, ki: (b, h, qi, 0)),
        out_shape=jax.ShapeDtypeStruct((B, H, S, hd), jnp.bfloat16),
        scratch_shapes=[
            pltpu.VMEM((tq, 1), jnp.float32),     # running max
            pltpu.VMEM((tq, 1), jnp.float32),     # running denominator
            pltpu.VMEM((tq, hd), jnp.float32),    # running context accumulator
        ],
        compiler_params=pltpu.CompilerParams(
            dimension_semantics=("parallel", "parallel", "parallel", "arbitrary"),
            vmem_limit_bytes=_vmem_limit(),
        ),
    )(q, k, v)


# ----------------------------------------------------------------------------- #
# Kernel 3: out-proj + residual + LN1 + F-tiled FFN + residual + LN2
# ----------------------------------------------------------------------------- #
def _post_attn_kernel(x_ref, ctx_ref, wo_ref, bo_ref, w1_ref, b1_ref, w2_ref, b2_ref,
                      g1_ref, be1_ref, g2_ref, be2_ref,
                      o_ref, xn1_sc, acc_sc, *, nhead, eps=1e-5):
    f32 = jnp.float32
    bf16 = jnp.bfloat16
    fi = pl.program_id(2)

    @pl.when(fi == 0)
    def _():
        x = x_ref[0]                                     # (ts, D) f32
        ctx = ctx_ref[0]                                 # (H, ts, hd) bf16
        attn = jnp.zeros_like(x)
        # per-head out-projection accumulation: sum_h ctx_h @ wo[h]  (no transpose/concat)
        for h in range(nhead):
            attn = attn + jnp.dot(ctx[h], wo_ref[h], preferred_element_type=f32)
        x1 = x + attn + bo_ref[...]                      # dropout1 = identity (eval)
        mu1 = jnp.mean(x1, axis=-1, keepdims=True)       # two-pass variance
        xc1 = x1 - mu1
        var1 = jnp.mean(xc1 * xc1, axis=-1, keepdims=True)
        xn1_sc[...] = xc1 * jax.lax.rsqrt(var1 + eps) * g1_ref[...] + be1_ref[...]
        acc_sc[...] = jnp.zeros_like(acc_sc)

    # FFN, F-chunk fi: h = relu(xn1 @ w1[:, chunk] + b1[chunk]);  acc += h @ w2[chunk, :]
    h1 = jnp.dot(xn1_sc[...].astype(bf16), w1_ref[...],
                 preferred_element_type=f32) + b1_ref[...]
    h1 = jnp.maximum(h1, 0.0)                            # relu; dropout = identity (eval)
    acc_sc[...] += jnp.dot(h1.astype(bf16), w2_ref[...], preferred_element_type=f32)

    @pl.when(fi == pl.num_programs(2) - 1)
    def _():
        x2 = xn1_sc[...] + acc_sc[...] + b2_ref[...]     # dropout2 = identity (eval)
        mu2 = jnp.mean(x2, axis=-1, keepdims=True)
        xc2 = x2 - mu2
        var2 = jnp.mean(xc2 * xc2, axis=-1, keepdims=True)
        o_ref[0] = (xc2 * jax.lax.rsqrt(var2 + eps) * g2_ref[...] + be2_ref[...]).astype(o_ref.dtype)


def _post_attention(x, ctx, lp, *, nhead, ts, tf):
    B, S, D = x.shape
    F = lp["w1_t"].shape[1]
    hd = D // nhead
    kernel = partial(_post_attn_kernel, nhead=nhead)
    return pl.pallas_call(
        kernel,
        grid=(B, S // ts, F // tf),
        in_specs=[
            pl.BlockSpec((1, ts, D), lambda b, si, fi: (b, si, 0)),
            pl.BlockSpec((1, nhead, ts, hd), lambda b, si, fi: (b, 0, si, 0)),
            _const_spec(lp["wo_hd"].shape),
            _const_spec(lp["bo"].shape),
            pl.BlockSpec((D, tf), lambda b, si, fi: (0, fi)),
            pl.BlockSpec((1, tf), lambda b, si, fi: (0, fi)),
            pl.BlockSpec((tf, D), lambda b, si, fi: (fi, 0)),
            _const_spec(lp["b2"].shape),
            _const_spec(lp["g1"].shape),
            _const_spec(lp["be1"].shape),
            _const_spec(lp["g2"].shape),
            _const_spec(lp["be2"].shape),
        ],
        out_specs=pl.BlockSpec((1, ts, D), lambda b, si, fi: (b, si, 0)),
        out_shape=jax.ShapeDtypeStruct((B, S, D), jnp.float32),
        scratch_shapes=[
            pltpu.VMEM((ts, D), jnp.float32),   # xn1 (post-LN1 activations)
            pltpu.VMEM((ts, D), jnp.float32),   # FFN output accumulator
        ],
        compiler_params=pltpu.CompilerParams(
            dimension_semantics=("parallel", "parallel", "arbitrary"),
            vmem_limit_bytes=_vmem_limit(),
        ),
    )(x, ctx, lp["wo_hd"], lp["bo"], lp["w1_t"], lp["b1"], lp["w2_t"], lp["b2"],
      lp["g1"], lp["be1"], lp["g2"], lp["be2"])


# ----------------------------------------------------------------------------- #
# Host-side parameter prep + layer / encoder wrappers
# ----------------------------------------------------------------------------- #
def prepare_layer_params(p, *, nhead):
    """One-time prep: transpose weights, fold Q scale, head-major wo, cast MXU weights to bf16."""
    D = p["wo"].shape[0]
    hd = D // nhead
    scale = 1.0 / math.sqrt(hd)
    wqkv = p["wqkv"].at[:D, :].multiply(scale)          # scale Q rows of in_proj_weight
    bqkv = p["bqkv"].at[:, :D].multiply(scale)          # scale Q part of in_proj_bias
    wo_t = p["wo"].T                                    # (D, D), rows indexed by ctx column
    return {
        "wqkv_t": jnp.asarray(wqkv.T, jnp.bfloat16),                  # (D, 3D)
        "bqkv":   jnp.asarray(bqkv, jnp.float32),                     # (1, 3D)
        "wo_hd":  jnp.asarray(wo_t.reshape(nhead, hd, D), jnp.bfloat16),  # (H, hd, D)
        "bo":     jnp.asarray(p["bo"], jnp.float32),
        "w1_t":   jnp.asarray(p["w1"].T, jnp.bfloat16),               # (D, F)
        "b1":     jnp.asarray(p["b1"], jnp.float32),
        "w2_t":   jnp.asarray(p["w2"].T, jnp.bfloat16),               # (F, D)
        "b2":     jnp.asarray(p["b2"], jnp.float32),
        "g1":     jnp.asarray(p["g1"], jnp.float32),
        "be1":    jnp.asarray(p["be1"], jnp.float32),
        "g2":     jnp.asarray(p["g2"], jnp.float32),
        "be2":    jnp.asarray(p["be2"], jnp.float32),
    }


def _encoder_layer_bsd(x, lp, *, nhead):
    """One encoder layer on x: (B, S, D) f32 -> (B, S, D) f32."""
    B, S, D = x.shape
    F = lp["w1_t"].shape[1]
    ts = _pick_s_tile(S)
    tq = ts
    tk = _pick_kv_tile(S)
    tf = _pick_f_tile(F)
    q, k, v = _qkv_projection(x, lp, nhead=nhead, ts=ts)
    ctx = _flash_attention(q, k, v, tq=tq, tk=tk)
    return _post_attention(x, ctx, lp, nhead=nhead, ts=ts, tf=tf)


def transformer_encoder(src, prepared_layer_params, *, nhead):
    """TransformerEncoder forward. src: (S, B, D) f32 -> (S, B, D) f32."""
    x = jnp.transpose(src, (1, 0, 2))                   # (B, S, D), transpose once
    for lp in prepared_layer_params:
        x = _encoder_layer_bsd(x, lp, nhead=nhead)
    # TODO(synk): optional final `norm` (TransformerEncoder(norm=...)) not applied (norm=None).
    return jnp.transpose(x, (1, 0, 2))


# ----------------------------------------------------------------------------- #
# Pure-JAX f32 reference (mirrors PyTorch semantics, eval mode)
# ----------------------------------------------------------------------------- #
def reference_encoder(src, raw_layers, *, nhead, eps=1e-5):
    S, B, D = src.shape
    hd = D // nhead
    x = jnp.transpose(src, (1, 0, 2))                   # (B, S, D)

    def ln(z, g, b):
        mu = jnp.mean(z, axis=-1, keepdims=True)
        var = jnp.mean((z - mu) ** 2, axis=-1, keepdims=True)
        return (z - mu) / jnp.sqrt(var + eps) * g[0] + b[0]

    for p in raw_layers:
        qkv = jnp.einsum("bsd,ed->bse", x, p["wqkv"]) + p["bqkv"][0]
        q, k, v = qkv[..., :D], qkv[..., D:2 * D], qkv[..., 2 * D:]
        q = q.reshape(B, S, nhead, hd).transpose(0, 2, 1, 3) / math.sqrt(hd)
        k = k.reshape(B, S, nhead, hd).transpose(0, 2, 1, 3)
        v = v.reshape(B, S, nhead, hd).transpose(0, 2, 1, 3)
        scores = jnp.einsum("bhqd,bhkd->bhqk", q, k)
        attn_p = jax.nn.softmax(scores, axis=-1)
        ctx = jnp.einsum("bhqk,bhkd->bhqd", attn_p, v)
        ctx = ctx.transpose(0, 2, 1, 3).reshape(B, S, D)
        attn = jnp.einsum("bsd,ed->bse", ctx, p["wo"]) + p["bo"][0]

        x1 = ln(x + attn, p["g1"], p["be1"])
        h = jax.nn.relu(jnp.einsum("bsd,fd->bsf", x1, p["w1"]) + p["b1"][0])
        ffn = jnp.einsum("bsf,df->bsd", h, p["w2"]) + p["b2"][0]
        x = ln(x1 + ffn, p["g2"], p["be2"])
    return jnp.transpose(x, (1, 0, 2))


# ----------------------------------------------------------------------------- #
# Main
# ----------------------------------------------------------------------------- #
if __name__ == "__main__":
    S, B, D, H, F = 8, 2, 32, 4, 64        # seq, batch, d_model, nhead, dim_feedforward
    NUM_LAYERS = 2

    key = jax.random.PRNGKey(0)
    keys = jax.random.split(key, NUM_LAYERS + 1)

    def make_layer_params(k):
        ks = jax.random.split(k, 8)
        return {
            "wqkv": 0.05 * jax.random.normal(ks[0], (3 * D, D), jnp.float32),
            "bqkv": 0.01 * jax.random.normal(ks[1], (1, 3 * D), jnp.float32),
            "wo":   0.05 * jax.random.normal(ks[2], (D, D), jnp.float32),
            "bo":   0.01 * jax.random.normal(ks[3], (1, D), jnp.float32),
            "w1":   0.05 * jax.random.normal(ks[4], (F, D), jnp.float32),
            "b1":   0.01 * jax.random.normal(ks[5], (1, F), jnp.float32),
            "w2":   0.05 * jax.random.normal(ks[6], (D, F), jnp.float32),
            "b2":   0.01 * jax.random.normal(ks[7], (1, D), jnp.float32),
            "g1":   jnp.ones((1, D), jnp.float32),
            "be1":  jnp.zeros((1, D), jnp.float32),
            "g2":   jnp.ones((1, D), jnp.float32),
            "be2":  jnp.zeros((1, D), jnp.float32),
        }

    raw_layers = [make_layer_params(keys[i]) for i in range(NUM_LAYERS)]
    src = jax.random.normal(keys[-1], (S, B, D), jnp.float32)

    prepped = [prepare_layer_params(p, nhead=H) for p in raw_layers]

    encoder_fn = jax.jit(transformer_encoder, static_argnames=("nhead",))
    out = encoder_fn(src, prepped, nhead=H)
    out = jax.block_until_ready(out)

    ref = reference_encoder(src, raw_layers, nhead=H)
    assert out.shape == (S, B, D)
    max_err = float(jnp.max(jnp.abs(out - ref)))
    # bf16 MXU operands / bf16 q,k,v,ctx intermediates -> loose tolerance vs f32 reference
    assert jnp.allclose(out, ref, atol=2e-2, rtol=2e-2), (
        f"mismatch vs reference (max abs err {max_err:.3e})")

    print("KERNEL_OK")
</pallas_src>

<mosaic_0001>
module attributes {stable_mosaic.version = 11 : i64} {
  func.func @_flash_attn_kernel(%arg0: i32, %arg1: i32, %arg2: i32, %arg3: i32, %arg4: memref<1x1x8x8xbf16, #tpu.memory_space<vmem>>, %arg5: memref<1x1x8x8xbf16, #tpu.memory_space<vmem>>, %arg6: memref<1x1x8x8xbf16, #tpu.memory_space<vmem>>, %arg7: memref<1x1x8x8xbf16, #tpu.memory_space<vmem>>, %arg8: memref<8x1xf32, #tpu.memory_space<vmem>>, %arg9: memref<8x1xf32, #tpu.memory_space<vmem>>, %arg10: memref<8x8xf32, #tpu.memory_space<vmem>>) attributes {dimension_semantics = [#tpu.dimension_semantics<parallel>, #tpu.dimension_semantics<parallel>, #tpu.dimension_semantics<parallel>, #tpu.dimension_semantics<arbitrary>], iteration_bounds = array<i64: 2, 4, 1, 1>, scalar_prefetch = 0 : i64, scratch_operands = 3 : i64, tpu.core_type = #tpu.core_type<tc>, window_params = [{transform_indices = @transform_0, window_bounds = array<i64: 1, 1, 8, 8>}, {transform_indices = @transform_1, window_bounds = array<i64: 1, 1, 8, 8>}, {transform_indices = @transform_2, window_bounds = array<i64: 1, 1, 8, 8>}, {transform_indices = @transform_3, window_bounds = array<i64: 1, 1, 8, 8>}]} {
    %c0_i32 = arith.constant 0 : i32
    %0 = arith.cmpi eq, %arg3, %c0_i32 : i32
    %1 = arith.extui %0 : i1 to i32
    %c0_i32_0 = arith.constant 0 : i32
    %2 = arith.cmpi ne, %1, %c0_i32_0 : i32
    scf.if %2 {
      %cst_29 = arith.constant 0xFF800000 : f32
      %36 = vector.broadcast %cst_29 : f32 to vector<8x1xf32>
      %c0_30 = arith.constant 0 : index
      %c0_31 = arith.constant 0 : index
      %37 = vector.load %arg8[%c0_30, %c0_31] : memref<8x1xf32, #tpu.memory_space<vmem>>, vector<8x1xf32>
      tpu.vector_store %arg8[%c0_30, %c0_31], %36 {strides = array<i32>} : memref<8x1xf32, #tpu.memory_space<vmem>>, vector<8x1xf32>,
      %cst_32 = arith.constant 0.000000e+00 : f32
      %38 = vector.broadcast %cst_32 : f32 to vector<8x1xf32>
      %c0_33 = arith.constant 0 : index
      %c0_34 = arith.constant 0 : index
      %39 = vector.load %arg9[%c0_33, %c0_34] : memref<8x1xf32, #tpu.memory_space<vmem>>, vector<8x1xf32>
      tpu.vector_store %arg9[%c0_33, %c0_34], %38 {strides = array<i32>} : memref<8x1xf32, #tpu.memory_space<vmem>>, vector<8x1xf32>,
      %cst_35 = arith.constant 0.000000e+00 : f32
      %40 = vector.broadcast %cst_35 : f32 to vector<8x8xf32>
      %c0_36 = arith.constant 0 : index
      %c0_37 = arith.constant 0 : index
      %41 = vector.load %arg10[%c0_36, %c0_37] : memref<8x8xf32, #tpu.memory_space<vmem>>, vector<8x8xf32>
      tpu.vector_store %arg10[%c0_36, %c0_37], %40 {strides = array<i32>} : memref<8x8xf32, #tpu.memory_space<vmem>>, vector<8x8xf32>,
    } else {
    }
    %c0 = arith.constant 0 : index
    %c0_1 = arith.constant 0 : index
    %c0_2 = arith.constant 0 : index
    %c0_3 = arith.constant 0 : index
    %3 = vector.load %arg4[%c0, %c0_1, %c0_2, %c0_3] : memref<1x1x8x8xbf16, #tpu.memory_space<vmem>>, vector<1x1x8x8xbf16>
    %4 = vector.shape_cast %3 : vector<1x1x8x8xbf16> to vector<8x8xbf16>
    %c0_4 = arith.constant 0 : index
    %c0_5 = arith.constant 0 : index
    %c0_6 = arith.constant 0 : index
    %c0_7 = arith.constant 0 : index
    %5 = vector.load %arg5[%c0_4, %c0_5, %c0_6, %c0_7] : memref<1x1x8x8xbf16, #tpu.memory_space<vmem>>, vector<1x1x8x8xbf16>
    %6 = vector.shape_cast %5 : vector<1x1x8x8xbf16> to vector<8x8xbf16>
    %cst = arith.constant dense<0.000000e+00> : vector<8x8xf32>
    %7 = tpu.matmul %4, %6, %cst {dimension_numbers = #tpu.dot_dimension_numbers<[1], [1], [0], [0], [0, 0, 1, 0], [], []>} : vector<8x8xbf16>, vector<8x8xbf16>, vector<8x8xf32> -> vector<8x8xf32>
    %c0_8 = arith.constant 0 : index
    %c0_9 = arith.constant 0 : index
    %8 = vector.load %arg8[%c0_8, %c0_9] : memref<8x1xf32, #tpu.memory_space<vmem>>, vector<8x1xf32>
    %cst_10 = arith.constant dense<0xFF800000> : vector<8xf32>
    %9 = vector.multi_reduction <maximumf>, %7, %cst_10 [1] : vector<8x8xf32> to vector<8xf32>
    %10 = vector.shape_cast %9 : vector<8xf32> to vector<8x1xf32>
    %11 = arith.maximumf %8, %10 : vector<8x1xf32>
    %12 = arith.subf %8, %11 : vector<8x1xf32>
    %13 = math.exp %12 : vector<8x1xf32>
    %14 = vector.broadcast %11 : vector<8x1xf32> to vector<8x8xf32>
    %15 = arith.subf %7, %14 : vector<8x8xf32>
    %16 = math.exp %15 : vector<8x8xf32>
    %c0_11 = arith.constant 0 : index
    %c0_12 = arith.constant 0 : index
    %17 = vector.load %arg9[%c0_11, %c0_12] : memref<8x1xf32, #tpu.memory_space<vmem>>, vector<8x1xf32>
    %18 = arith.mulf %13, %17 : vector<8x1xf32>
    %cst_13 = arith.constant dense<0.000000e+00> : vector<8xf32>
    %19 = vector.multi_reduction <add>, %16, %cst_13 [1] : vector<8x8xf32> to vector<8xf32>
    %20 = vector.shape_cast %19 : vector<8xf32> to vector<8x1xf32>
    %21 = arith.addf %18, %20 : vector<8x1xf32>
    %c0_14 = arith.constant 0 : index
    %c0_15 = arith.constant 0 : index
    %22 = vector.load %arg9[%c0_14, %c0_15] : memref<8x1xf32, #tpu.memory_space<vmem>>, vector<8x1xf32>
    tpu.vector_store %arg9[%c0_14, %c0_15], %21 {strides = array<i32>} : memref<8x1xf32, #tpu.memory_space<vmem>>, vector<8x1xf32>,
    %c0_16 = arith.constant 0 : index
    %c0_17 = arith.constant 0 : index
    %23 = vector.load %arg10[%c0_16, %c0_17] : memref<8x8xf32, #tpu.memory_space<vmem>>, vector<8x8xf32>
    %24 = vector.broadcast %13 : vector<8x1xf32> to vector<8x8xf32>
    %25 = arith.mulf %24, %23 : vector<8x8xf32>
    %26 = arith.truncf %16 : vector<8x8xf32> to vector<8x8xbf16>
    %c0_18 = arith.constant 0 : index
    %c0_19 = arith.constant 0 : index
    %c0_20 = arith.constant 0 : index
    %c0_21 = arith.constant 0 : index
    %27 = vector.load %arg6[%c0_18, %c0_19, %c0_20, %c0_21] : memref<1x1x8x8xbf16, #tpu.memory_space<vmem>>, vector<1x1x8x8xbf16>
    %28 = vector.shape_cast %27 : vector<1x1x8x8xbf16> to vector<8x8xbf16>
    %cst_22 = arith.constant dense<0.000000e+00> : vector<8x8xf32>
    %29 = tpu.matmul %26, %28, %cst_22 {dimension_numbers = #tpu.dot_dimension_numbers<[1], [0], [0], [1], [0, 0, 1, 1], [], []>} : vector<8x8xbf16>, vector<8x8xbf16>, vector<8x8xf32> -> vector<8x8xf32>
    %30 = arith.addf %25, %29 : vector<8x8xf32>
    %c0_23 = arith.constant 0 : index
    %c0_24 = arith.constant 0 : index
    %31 = vector.load %arg10[%c0_23, %c0_24] : memref<8x8xf32, #tpu.memory_space<vmem>>, vector<8x8xf32>
    tpu.vector_store %arg10[%c0_23, %c0_24], %30 {strides = array<i32>} : memref<8x8xf32, #tpu.memory_space<vmem>>, vector<8x8xf32>,
    %c0_25 = arith.constant 0 : index
    %c0_26 = arith.constant 0 : index
    %32 = vector.load %arg8[%c0_25, %c0_26] : memref<8x1xf32, #tpu.memory_space<vmem>>, vector<8x1xf32>
    tpu.vector_store %arg8[%c0_25, %c0_26], %11 {strides = array<i32>} : memref<8x1xf32, #tpu.memory_space<vmem>>, vector<8x1xf32>,
    %c0_i32_27 = arith.constant 0 : i32
    %33 = arith.cmpi eq, %arg3, %c0_i32_27 : i32
    %34 = arith.extui %33 : i1 to i32
    %c0_i32_28 = arith.constant 0 : i32
    %35 = arith.cmpi ne, %34, %c0_i32_28 : i32
    scf.if %35 {
      %c0_29 = arith.constant 0 : index
      %c0_30 = arith.constant 0 : index
      %36 = vector.load %arg10[%c0_29, %c0_30] : memref<8x8xf32, #tpu.memory_space<vmem>>, vector<8x8xf32>
      %c0_31 = arith.constant 0 : index
      %c0_32 = arith.constant 0 : index
      %37 = vector.load %arg9[%c0_31, %c0_32] : memref<8x1xf32, #tpu.memory_space<vmem>>, vector<8x1xf32>
      %38 = vector.broadcast %37 : vector<8x1xf32> to vector<8x8xf32>
      %39 = arith.divf %36, %38 : vector<8x8xf32>
      %40 = arith.truncf %39 : vector<8x8xf32> to vector<8x8xbf16>
      %c0_33 = arith.constant 0 : index
      %c0_34 = arith.constant 0 : index
      %c0_35 = arith.constant 0 : index
      %c0_36 = arith.constant 0 : index
      %41 = vector.load %arg7[%c0_33, %c0_34, %c0_35, %c0_36] : memref<1x1x8x8xbf16, #tpu.memory_space<vmem>>, vector<1x1x8x8xbf16>
      %42 = vector.shape_cast %41 : vector<1x1x8x8xbf16> to vector<8x8xbf16>
      %43 = vector.shape_cast %40 : vector<8x8xbf16> to vector<1x1x8x8xbf16>
      tpu.vector_store %arg7[%c0_33, %c0_34, %c0_35, %c0_36], %43 {strides = array<i32>} : memref<1x1x8x8xbf16, #tpu.memory_space<vmem>>, vector<1x1x8x8xbf16>,
    } else {
    }
    return
  }
  func.func @transform_0(%arg0: i32, %arg1: i32, %arg2: i32, %arg3: i32) -> (i32, i32, i32, i32) {
    %c0_i32 = arith.constant 0 : i32
    %c0_i32_0 = arith.constant 0 : i32
    return %arg0, %arg1, %arg2, %c0_i32 : i32, i32, i32, i32
  }
  func.func @transform_1(%arg0: i32, %arg1: i32, %arg2: i32, %arg3: i32) -> (i32, i32, i32, i32) {
    %c0_i32 = arith.constant 0 : i32
    %c0_i32_0 = arith.constant 0 : i32
    return %arg0, %arg1, %arg3, %c0_i32 : i32, i32, i32, i32
  }
  func.func @transform_2(%arg0: i32, %arg1: i32, %arg2: i32, %arg3: i32) -> (i32, i32, i32, i32) {
    %c0_i32 = arith.constant 0 : i32
    %c0_i32_0 = arith.constant 0 : i32
    return %arg0, %arg1, %arg3, %c0_i32 : i32, i32, i32, i32
  }
  func.func @transform_3(%arg0: i32, %arg1: i32, %arg2: i32, %arg3: i32) -> (i32, i32, i32, i32) {
    %c0_i32 = arith.constant 0 : i32
    %c0_i32_0 = arith.constant 0 : i32
    return %arg0, %arg1, %arg2, %c0_i32 : i32, i32, i32, i32
  }
}

module attributes {stable_mosaic.version = 11 : i64} {
  func.func @_qkv_proj_kernel(%arg0: i32, %arg1: i32, %arg2: memref<1x8x32xf32, #tpu.memory_space<vmem>>, %arg3: memref<32x96xbf16, #tpu.memory_space<vmem>>, %arg4: memref<1x96xf32, #tpu.memory_space<vmem>>, %arg5: memref<1x4x8x8xbf16, #tpu.memory_space<vmem>>, %arg6: memref<1x4x8x8xbf16, #tpu.memory_space<vmem>>, %arg7: memref<1x4x8x8xbf16, #tpu.memory_space<vmem>>) attributes {dimension_semantics = [#tpu.dimension_semantics<parallel>, #tpu.dimension_semantics<parallel>], iteration_bounds = array<i64: 2, 1>, scalar_prefetch = 0 : i64, scratch_operands = 0 : i64, tpu.core_type = #tpu.core_type<tc>, window_params = [{transform_indices = @transform_0, window_bounds = array<i64: 1, 8, 32>}, {pipeline_mode = #tpu.pipeline_mode<synchronous>, transform_indices = @transform_1, window_bounds = array<i64: 32, 96>}, {pipeline_mode = #tpu.pipeline_mode<synchronous>, transform_indices = @transform_2, window_bounds = array<i64: 1, 96>}, {transform_indices = @transform_3, window_bounds = array<i64: 1, 4, 8, 8>}, {transform_indices = @transform_4, window_bounds = array<i64: 1, 4, 8, 8>}, {transform_indices = @transform_5, window_bounds = array<i64: 1, 4, 8, 8>}]} {
    %c0 = arith.constant 0 : index
    %c0_0 = arith.constant 0 : index
    %c0_1 = arith.constant 0 : index
    %0 = vector.load %arg2[%c0, %c0_0, %c0_1] : memref<1x8x32xf32, #tpu.memory_space<vmem>>, vector<1x8x32xf32>
    %1 = vector.shape_cast %0 : vector<1x8x32xf32> to vector<8x32xf32>
    %2 = arith.truncf %1 : vector<8x32xf32> to vector<8x32xbf16>
    %c0_2 = arith.constant 0 : index
    %c0_3 = arith.constant 0 : index
    %3 = vector.load %arg3[%c0_2, %c0_3] : memref<32x96xbf16, #tpu.memory_space<vmem>>, vector<32x96xbf16>
    %cst = arith.constant dense<0.000000e+00> : vector<8x96xf32>
    %4 = tpu.matmul %2, %3, %cst {dimension_numbers = #tpu.dot_dimension_numbers<[1], [0], [0], [1], [0, 0, 1, 1], [], []>} : vector<8x32xbf16>, vector<32x96xbf16>, vector<8x96xf32> -> vector<8x96xf32>
    %c0_4 = arith.constant 0 : index
    %c0_5 = arith.constant 0 : index
    %5 = vector.load %arg4[%c0_4, %c0_5] : memref<1x96xf32, #tpu.memory_space<vmem>>, vector<1x96xf32>
    %6 = vector.broadcast %5 : vector<1x96xf32> to vector<8x96xf32>
    %7 = arith.addf %4, %6 : vector<8x96xf32>
    %8 = vector.extract_strided_slice %7 {offsets = [0, 0], sizes = [8, 8], strides = [1, 1]} : vector<8x96xf32> to vector<8x8xf32>
    %9 = arith.truncf %8 : vector<8x8xf32> to vector<8x8xbf16>
    %c0_6 = arith.constant 0 : index
    %c0_7 = arith.constant 0 : index
    %c0_8 = arith.constant 0 : index
    %c0_9 = arith.constant 0 : index
    %10 = vector.load %arg5[%c0_6, %c0_7, %c0_8, %c0_9] : memref<1x4x8x8xbf16, #tpu.memory_space<vmem>>, vector<1x1x8x8xbf16>
    %11 = vector.shape_cast %10 : vector<1x1x8x8xbf16> to vector<8x8xbf16>
    %12 = vector.shape_cast %9 : vector<8x8xbf16> to vector<1x1x8x8xbf16>
    tpu.vector_store %arg5[%c0_6, %c0_7, %c0_8, %c0_9], %12 {strides = array<i32>} : memref<1x4x8x8xbf16, #tpu.memory_space<vmem>>, vector<1x1x8x8xbf16>,
    %13 = vector.extract_strided_slice %7 {offsets = [0, 32], sizes = [8, 8], strides = [1, 1]} : vector<8x96xf32> to vector<8x8xf32>
    %14 = arith.truncf %13 : vector<8x8xf32> to vector<8x8xbf16>
    %c0_10 = arith.constant 0 : index
    %c0_11 = arith.constant 0 : index
    %c0_12 = arith.constant 0 : index
    %c0_13 = arith.constant 0 : index
    %15 = vector.load %arg6[%c0_10, %c0_11, %c0_12, %c0_13] : memref<1x4x8x8xbf16, #tpu.memory_space<vmem>>, vector<1x1x8x8xbf16>
    %16 = vector.shape_cast %15 : vector<1x1x8x8xbf16> to vector<8x8xbf16>
    %17 = vector.shape_cast %14 : vector<8x8xbf16> to vector<1x1x8x8xbf16>
    tpu.vector_store %arg6[%c0_10, %c0_11, %c0_12, %c0_13], %17 {strides = array<i32>} : memref<1x4x8x8xbf16, #tpu.memory_space<vmem>>, vector<1x1x8x8xbf16>,
    %18 = vector.extract_strided_slice %7 {offsets = [0, 64], sizes = [8, 8], strides = [1, 1]} : vector<8x96xf32> to vector<8x8xf32>
    %19 = arith.truncf %18 : vector<8x8xf32> to vector<8x8xbf16>
    %c0_14 = arith.constant 0 : index
    %c0_15 = arith.constant 0 : index
    %c0_16 = arith.constant 0 : index
    %c0_17 = arith.constant 0 : index
    %20 = vector.load %arg7[%c0_14, %c0_15, %c0_16, %c0_17] : memref<1x4x8x8xbf16, #tpu.memory_space<vmem>>, vector<1x1x8x8xbf16>
    %21 = vector.shape_cast %20 : vector<1x1x8x8xbf16> to vector<8x8xbf16>
    %22 = vector.shape_cast %19 : vector<8x8xbf16> to vector<1x1x8x8xbf16>
    tpu.vector_store %arg7[%c0_14, %c0_15, %c0_16, %c0_17], %22 {strides = array<i32>} : memref<1x4x8x8xbf16, #tpu.memory_space<vmem>>, vector<1x1x8x8xbf16>,
    %23 = vector.extract_strided_slice %7 {offsets = [0, 8], sizes = [8, 8], strides = [1, 1]} : vector<8x96xf32> to vector<8x8xf32>
    %24 = arith.truncf %23 : vector<8x8xf32> to vector<8x8xbf16>
    %c0_18 = arith.constant 0 : index
    %c1 = arith.constant 1 : index
    %c0_19 = arith.constant 0 : index
    %c0_20 = arith.constant 0 : index
    %25 = vector.load %arg5[%c0_18, %c1, %c0_19, %c0_20] : memref<1x4x8x8xbf16, #tpu.memory_space<vmem>>, vector<1x1x8x8xbf16>
    %26 = vector.shape_cast %25 : vector<1x1x8x8xbf16> to vector<8x8xbf16>
    %27 = vector.shape_cast %24 : vector<8x8xbf16> to vector<1x1x8x8xbf16>
    tpu.vector_store %arg5[%c0_18, %c1, %c0_19, %c0_20], %27 {strides = array<i32>} : memref<1x4x8x8xbf16, #tpu.memory_space<vmem>>, vector<1x1x8x8xbf16>,
    %28 = vector.extract_strided_slice %7 {offsets = [0, 40], sizes = [8, 8], strides = [1, 1]} : vector<8x96xf32> to vector<8x8xf32>
    %29 = arith.truncf %28 : vector<8x8xf32> to vector<8x8xbf16>
    %c0_21 = arith.constant 0 : index
    %c1_22 = arith.constant 1 : index
    %c0_23 = arith.constant 0 : index
    %c0_24 = arith.constant 0 : index
    %30 = vector.load %arg6[%c0_21, %c1_22, %c0_23, %c0_24] : memref<1x4x8x8xbf16, #tpu.memory_space<vmem>>, vector<1x1x8x8xbf16>
    %31 = vector.shape_cast %30 : vector<1x1x8x8xbf16> to vector<8x8xbf16>
    %32 = vector.shape_cast %29 : vector<8x8xbf16> to vector<1x1x8x8xbf16>
    tpu.vector_store %arg6[%c0_21, %c1_22, %c0_23, %c0_24], %32 {strides = array<i32>} : memref<1x4x8x8xbf16, #tpu.memory_space<vmem>>, vector<1x1x8x8xbf16>,
    %33 = vector.extract_strided_slice %7 {offsets = [0, 72], sizes = [8, 8], strides = [1, 1]} : vector<8x96xf32> to vector<8x8xf32>
    %34 = arith.truncf %33 : vector<8x8xf32> to vector<8x8xbf16>
    %c0_25 = arith.constant 0 : index
    %c1_26 = arith.constant 1 : index
    %c0_27 = arith.constant 0 : index
    %c0_28 = arith.constant 0 : index
    %35 = vector.load %arg7[%c0_25, %c1_26, %c0_27, %c0_28] : memref<1x4x8x8xbf16, #tpu.memory_space<vmem>>, vector<1x1x8x8xbf16>
    %36 = vector.shape_cast %35 : vector<1x1x8x8xbf16> to vector<8x8xbf16>
    %37 = vector.shape_cast %34 : vector<8x8xbf16> to vector<1x1x8x8xbf16>
    tpu.vector_store %arg7[%c0_25, %c1_26, %c0_27, %c0_28], %37 {strides = array<i32>} : memref<1x4x8x8xbf16, #tpu.memory_space<vmem>>, vector<1x1x8x8xbf16>,
    %38 = vector.extract_strided_slice %7 {offsets = [0, 16], sizes = [8, 8], strides = [1, 1]} : vector<8x96xf32> to vector<8x8xf32>
    %39 = arith.truncf %38 : vector<8x8xf32> to vector<8x8xbf16>
    %c0_29 = arith.constant 0 : index
    %c2 = arith.constant 2 : index
    %c0_30 = arith.constant 0 : index
    %c0_31 = arith.constant 0 : index
    %40 = vector.load %arg5[%c0_29, %c2, %c0_30, %c0_31] : memref<1x4x8x8xbf16, #tpu.memory_space<vmem>>, vector<1x1x8x8xbf16>
    %41 = vector.shape_cast %40 : vector<1x1x8x8xbf16> to vector<8x8xbf16>
    %42 = vector.shape_cast %39 : vector<8x8xbf16> to vector<1x1x8x8xbf16>
    tpu.vector_store %arg5[%c0_29, %c2, %c0_30, %c0_31], %42 {strides = array<i32>} : memref<1x4x8x8xbf16, #tpu.memory_space<vmem>>, vector<1x1x8x8xbf16>,
    %43 = vector.extract_strided_slice %7 {offsets = [0, 48], sizes = [8, 8], strides = [1, 1]} : vector<8x96xf32> to vector<8x8xf32>
    %44 = arith.truncf %43 : vector<8x8xf32> to vector<8x8xbf16>
    %c0_32 = arith.constant 0 : index
    %c2_33 = arith.constant 2 : index
    %c0_34 = arith.constant 0 : index
    %c0_35 = arith.constant 0 : index
    %45 = vector.load %arg6[%c0_32, %c2_33, %c0_34, %c0_35] : memref<1x4x8x8xbf16, #tpu.memory_space<vmem>>, vector<1x1x8x8xbf16>
    %46 = vector.shape_cast %45 : vector<1x1x8x8xbf16> to vector<8x8xbf16>
    %47 = vector.shape_cast %44 : vector<8x8xbf16> to vector<1x1x8x8xbf16>
    tpu.vector_store %arg6[%c0_32, %c2_33, %c0_34, %c0_35], %47 {strides = array<i32>} : memref<1x4x8x8xbf16, #tpu.memory_space<vmem>>, vector<1x1x8x8xbf16>,
    %48 = vector.extract_strided_slice %7 {offsets = [0, 80], sizes = [8, 8], strides = [1, 1]} : vector<8x96xf32> to vector<8x8xf32>
    %49 = arith.truncf %48 : vector<8x8xf32> to vector<8x8xbf16>
    %c0_36 = arith.constant 0 : index
    %c2_37 = arith.constant 2 : index
    %c0_38 = arith.constant 0 : index
    %c0_39 = arith.constant 0 : index
    %50 = vector.load %arg7[%c0_36, %c2_37, %c0_38, %c0_39] : memref<1x4x8x8xbf16, #tpu.memory_space<vmem>>, vector<1x1x8x8xbf16>
    %51 = vector.shape_cast %50 : vector<1x1x8x8xbf16> to vector<8x8xbf16>
    %52 = vector.shape_cast %49 : vector<8x8xbf16> to vector<1x1x8x8xbf16>
    tpu.vector_store %arg7[%c0_36, %c2_37, %c0_38, %c0_39], %52 {strides = array<i32>} : memref<1x4x8x8xbf16, #tpu.memory_space<vmem>>, vector<1x1x8x8xbf16>,
    %53 = vector.extract_strided_slice %7 {offsets = [0, 24], sizes = [8, 8], strides = [1, 1]} : vector<8x96xf32> to vector<8x8xf32>
    %54 = arith.truncf %53 : vector<8x8xf32> to vector<8x8xbf16>
    %c0_40 = arith.constant 0 : index
    %c3 = arith.constant 3 : index
    %c0_41 = arith.constant 0 : index
    %c0_42 = arith.constant 0 : index
    %55 = vector.load %arg5[%c0_40, %c3, %c0_41, %c0_42] : memref<1x4x8x8xbf16, #tpu.memory_space<vmem>>, vector<1x1x8x8xbf16>
    %56 = vector.shape_cast %55 : vector<1x1x8x8xbf16> to vector<8x8xbf16>
    %57 = vector.shape_cast %54 : vector<8x8xbf16> to vector<1x1x8x8xbf16>
    tpu.vector_store %arg5[%c0_40, %c3, %c0_41, %c0_42], %57 {strides = array<i32>} : memref<1x4x8x8xbf16, #tpu.memory_space<vmem>>, vector<1x1x8x8xbf16>,
    %58 = vector.extract_strided_slice %7 {offsets = [0, 56], sizes = [8, 8], strides = [1, 1]} : vector<8x96xf32> to vector<8x8xf32>
    %59 = arith.truncf %58 : vector<8x8xf32> to vector<8x8xbf16>
    %c0_43 = arith.constant 0 : index
    %c3_44 = arith.constant 3 : index
    %c0_45 = arith.constant 0 : index
    %c0_46 = arith.constant 0 : index
    %60 = vector.load %arg6[%c0_43, %c3_44, %c0_45, %c0_46] : memref<1x4x8x8xbf16, #tpu.memory_space<vmem>>, vector<1x1x8x8xbf16>
    %61 = vector.shape_cast %60 : vector<1x1x8x8xbf16> to vector<8x8xbf16>
    %62 = vector.shape_cast %59 : vector<8x8xbf16> to vector<1x1x8x8xbf16>
    tpu.vector_store %arg6[%c0_43, %c3_44, %c0_45, %c0_46], %62 {strides = array<i32>} : memref<1x4x8x8xbf16, #tpu.memory_space<vmem>>, vector<1x1x8x8xbf16>,
    %63 = vector.extract_strided_slice %7 {offsets = [0, 88], sizes = [8, 8], strides = [1, 1]} : vector<8x96xf32> to vector<8x8xf32>
    %64 = arith.truncf %63 : vector<8x8xf32> to vector<8x8xbf16>
    %c0_47 = arith.constant 0 : index
    %c3_48 = arith.constant 3 : index
    %c0_49 = arith.constant 0 : index
    %c0_50 = arith.constant 0 : index
    %65 = vector.load %arg7[%c0_47, %c3_48, %c0_49, %c0_50] : memref<1x4x8x8xbf16, #tpu.memory_space<vmem>>, vector<1x1x8x8xbf16>
    %66 = vector.shape_cast %65 : vector<1x1x8x8xbf16> to vector<8x8xbf16>
    %67 = vector.shape_cast %64 : vector<8x8xbf16> to vector<1x1x8x8xbf16>
    tpu.vector_store %arg7[%c0_47, %c3_48, %c0_49, %c0_50], %67 {strides = array<i32>} : memref<1x4x8x8xbf16, #tpu.memory_space<vmem>>, vector<1x1x8x8xbf16>,
    return
  }
  func.func @transform_0(%arg0: i32, %arg1: i32) -> (i32, i32, i32) {
    %c0_i32 = arith.constant 0 : i32
    %c0_i32_0 = arith.constant 0 : i32
    return %arg0, %arg1, %c0_i32 : i32, i32, i32
  }
  func.func @transform_1(%arg0: i32, %arg1: i32) -> (i32, i32) {
    %c0_i32 = arith.constant 0 : i32
    %c0_i32_0 = arith.constant 0 : i32
    %c0_i32_1 = arith.constant 0 : i32
    return %c0_i32, %c0_i32_0 : i32, i32
  }
  func.func @transform_2(%arg0: i32, %arg1: i32) -> (i32, i32) {
    %c0_i32 = arith.constant 0 : i32
    %c0_i32_0 = arith.constant 0 : i32
    %c0_i32_1 = arith.constant 0 : i32
    return %c0_i32, %c0_i32_0 : i32, i32
  }
  func.func @transform_3(%arg0: i32, %arg1: i32) -> (i32, i32, i32, i32) {
    %c0_i32 = arith.constant 0 : i32
    %c0_i32_0 = arith.constant 0 : i32
    %c0_i32_1 = arith.constant 0 : i32
    return %arg0, %c0_i32, %arg1, %c0_i32_0 : i32, i32, i32, i32
  }
  func.func @transform_4(%arg0: i32, %arg1: i32) -> (i32, i32, i32, i32) {
    %c0_i32 = arith.constant 0 : i32
    %c0_i32_0 = arith.constant 0 : i32
    %c0_i32_1 = arith.constant 0 : i32
    return %arg0, %c0_i32, %arg1, %c0_i32_0 : i32, i32, i32, i32
  }
  func.func @transform_5(%arg0: i32, %arg1: i32) -> (i32, i32, i32, i32) {
    %c0_i32 = arith.constant 0 : i32
    %c0_i32_0 = arith.constant 0 : i32
    %c0_i32_1 = arith.constant 0 : i32
    return %arg0, %c0_i32, %arg1, %c0_i32_0 : i32, i32, i32, i32
  }
}

module attributes {stable_mosaic.version = 11 : i64} {
  func.func @_post_attn_kernel(%arg0: i32, %arg1: i32, %arg2: i32, %arg3: memref<1x8x32xf32, #tpu.memory_space<vmem>>, %arg4: memref<1x4x8x8xbf16, #tpu.memory_space<vmem>>, %arg5: memref<4x8x32xbf16, #tpu.memory_space<vmem>>, %arg6: memref<1x32xf32, #tpu.memory_space<vmem>>, %arg7: memref<32x64xbf16, #tpu.memory_space<vmem>>, %arg8: memref<1x64xf32, #tpu.memory_space<vmem>>, %arg9: memref<64x32xbf16, #tpu.memory_space<vmem>>, %arg10: memref<1x32xf32, #tpu.memory_space<vmem>>, %arg11: memref<1x32xf32, #tpu.memory_space<vmem>>, %arg12: memref<1x32xf32, #tpu.memory_space<vmem>>, %arg13: memref<1x32xf32, #tpu.memory_space<vmem>>, %arg14: memref<1x32xf32, #tpu.memory_space<vmem>>, %arg15: memref<1x8x32xf32, #tpu.memory_space<vmem>>, %arg16: memref<8x32xf32, #tpu.memory_space<vmem>>, %arg17: memref<8x32xf32, #tpu.memory_space<vmem>>) attributes {dimension_semantics = [#tpu.dimension_semantics<parallel>, #tpu.dimension_semantics<parallel>, #tpu.dimension_semantics<arbitrary>], iteration_bounds = array<i64: 2, 1, 1>, scalar_prefetch = 0 : i64, scratch_operands = 2 : i64, tpu.core_type = #tpu.core_type<tc>, window_params = [{transform_indices = @transform_0, window_bounds = array<i64: 1, 8, 32>}, {transform_indices = @transform_1, window_bounds = array<i64: 1, 4, 8, 8>}, {pipeline_mode = #tpu.pipeline_mode<synchronous>, transform_indices = @transform_2, window_bounds = array<i64: 4, 8, 32>}, {pipeline_mode = #tpu.pipeline_mode<synchronous>, transform_indices = @transform_3, window_bounds = array<i64: 1, 32>}, {transform_indices = @transform_4, window_bounds = array<i64: 32, 64>}, {transform_indices = @transform_5, window_bounds = array<i64: 1, 64>}, {transform_indices = @transform_6, window_bounds = array<i64: 64, 32>}, {pipeline_mode = #tpu.pipeline_mode<synchronous>, transform_indices = @transform_7, window_bounds = array<i64: 1, 32>}, {pipeline_mode = #tpu.pipeline_mode<synchronous>, transform_indices = @transform_8, window_bounds = array<i64: 1, 32>}, {pipeline_mode = #tpu.pipeline_mode<synchronous>, transform_indices = @transform_9, window_bounds = array<i64: 1, 32>}, {pipeline_mode = #tpu.pipeline_mode<synchronous>, transform_indices = @transform_10, window_bounds = array<i64: 1, 32>}, {pipeline_mode = #tpu.pipeline_mode<synchronous>, transform_indices = @transform_11, window_bounds = array<i64: 1, 32>}, {transform_indices = @transform_12, window_bounds = array<i64: 1, 8, 32>}]} {
    %c0_i32 = arith.constant 0 : i32
    %0 = arith.cmpi eq, %arg2, %c0_i32 : i32
    %1 = arith.extui %0 : i1 to i32
    %c0_i32_0 = arith.constant 0 : i32
    %2 = arith.cmpi ne, %1, %c0_i32_0 : i32
    scf.if %2 {
      %c0_16 = arith.constant 0 : index
      %c0_17 = arith.constant 0 : index
      %c0_18 = arith.constant 0 : index
      %21 = vector.load %arg3[%c0_16, %c0_17, %c0_18] : memref<1x8x32xf32, #tpu.memory_space<vmem>>, vector<1x8x32xf32>
      %22 = vector.shape_cast %21 : vector<1x8x32xf32> to vector<8x32xf32>
      %c0_19 = arith.constant 0 : index
      %c0_20 = arith.constant 0 : index
      %c0_21 = arith.constant 0 : index
      %c0_22 = arith.constant 0 : index
      %23 = vector.load %arg4[%c0_19, %c0_20, %c0_21, %c0_22] : memref<1x4x8x8xbf16, #tpu.memory_space<vmem>>, vector<1x4x8x8xbf16>
      %24 = vector.shape_cast %23 : vector<1x4x8x8xbf16> to vector<4x8x8xbf16>
      %cst_23 = arith.constant 0.000000e+00 : f32
      %25 = vector.broadcast %cst_23 : f32 to vector<8x32xf32>
      %26 = vector.extract_strided_slice %24 {offsets = [0, 0, 0], sizes = [1, 8, 8], strides = [1, 1, 1]} : vector<4x8x8xbf16> to vector<1x8x8xbf16>
      %27 = vector.shape_cast %26 : vector<1x8x8xbf16> to vector<8x8xbf16>
      %c0_24 = arith.constant 0 : index
      %c0_25 = arith.constant 0 : index
      %c0_26 = arith.constant 0 : index
      %28 = vector.load %arg5[%c0_24, %c0_25, %c0_26] : memref<4x8x32xbf16, #tpu.memory_space<vmem>>, vector<1x8x32xbf16>
      %29 = vector.shape_cast %28 : vector<1x8x32xbf16> to vector<8x32xbf16>
      %cst_27 = arith.constant dense<0.000000e+00> : vector<8x32xf32>
      %30 = tpu.matmul %27, %29, %cst_27 {dimension_numbers = #tpu.dot_dimension_numbers<[1], [0], [0], [1], [0, 0, 1, 1], [], []>} : vector<8x8xbf16>, vector<8x32xbf16>, vector<8x32xf32> -> vector<8x32xf32>
      %31 = arith.addf %25, %30 : vector<8x32xf32>
      %32 = vector.extract_strided_slice %24 {offsets = [1, 0, 0], sizes = [1, 8, 8], strides = [1, 1, 1]} : vector<4x8x8xbf16> to vector<1x8x8xbf16>
      %33 = vector.shape_cast %32 : vector<1x8x8xbf16> to vector<8x8xbf16>
      %c1 = arith.constant 1 : index
      %c0_28 = arith.constant 0 : index
      %c0_29 = arith.constant 0 : index
      %34 = vector.load %arg5[%c1, %c0_28, %c0_29] : memref<4x8x32xbf16, #tpu.memory_space<vmem>>, vector<1x8x32xbf16>
      %35 = vector.shape_cast %34 : vector<1x8x32xbf16> to vector<8x32xbf16>
      %cst_30 = arith.constant dense<0.000000e+00> : vector<8x32xf32>
      %36 = tpu.matmul %33, %35, %cst_30 {dimension_numbers = #tpu.dot_dimension_numbers<[1], [0], [0], [1], [0, 0, 1, 1], [], []>} : vector<8x8xbf16>, vector<8x32xbf16>, vector<8x32xf32> -> vector<8x32xf32>
      %37 = arith.addf %31, %36 : vector<8x32xf32>
      %38 = vector.extract_strided_slice %24 {offsets = [2, 0, 0], sizes = [1, 8, 8], strides = [1, 1, 1]} : vector<4x8x8xbf16> to vector<1x8x8xbf16>
      %39 = vector.shape_cast %38 : vector<1x8x8xbf16> to vector<8x8xbf16>
      %c2 = arith.constant 2 : index
      %c0_31 = arith.constant 0 : index
      %c0_32 = arith.constant 0 : index
      %40 = vector.load %arg5[%c2, %c0_31, %c0_32] : memref<4x8x32xbf16, #tpu.memory_space<vmem>>, vector<1x8x32xbf16>
      %41 = vector.shape_cast %40 : vector<1x8x32xbf16> to vector<8x32xbf16>
      %cst_33 = arith.constant dense<0.000000e+00> : vector<8x32xf32>
      %42 = tpu.matmul %39, %41, %cst_33 {dimension_numbers = #tpu.dot_dimension_numbers<[1], [0], [0], [1], [0, 0, 1, 1], [], []>} : vector<8x8xbf16>, vector<8x32xbf16>, vector<8x32xf32> -> vector<8x32xf32>
      %43 = arith.addf %37, %42 : vector<8x32xf32>
      %44 = vector.extract_strided_slice %24 {offsets = [3, 0, 0], sizes = [1, 8, 8], strides = [1, 1, 1]} : vector<4x8x8xbf16> to vector<1x8x8xbf16>
      %45 = vector.shape_cast %44 : vector<1x8x8xbf16> to vector<8x8xbf16>
      %c3 = arith.constant 3 : index
      %c0_34 = arith.constant 0 : index
      %c0_35 = arith.constant 0 : index
      %46 = vector.load %arg5[%c3, %c0_34, %c0_35] : memref<4x8x32xbf16, #tpu.memory_space<vmem>>, vector<1x8x32xbf16>
      %47 = vector.shape_cast %46 : vector<1x8x32xbf16> to vector<8x32xbf16>
      %cst_36 = arith.constant dense<0.000000e+00> : vector<8x32xf32>
      %48 = tpu.matmul %45, %47, %cst_36 {dimension_numbers = #tpu.dot_dimension_numbers<[1], [0], [0], [1], [0, 0, 1, 1], [], []>} : vector<8x8xbf16>, vector<8x32xbf16>, vector<8x32xf32> -> vector<8x32xf32>
      %49 = arith.addf %43, %48 : vector<8x32xf32>
      %50 = arith.addf %22, %49 : vector<8x32xf32>
      %c0_37 = arith.constant 0 : index
      %c0_38 = arith.constant 0 : index
      %51 = vector.load %arg6[%c0_37, %c0_38] : memref<1x32xf32, #tpu.memory_space<vmem>>, vector<1x32xf32>
      %52 = vector.broadcast %51 : vector<1x32xf32> to vector<8x32xf32>
      %53 = arith.addf %50, %52 : vector<8x32xf32>
      %cst_39 = arith.constant dense<0.000000e+00> : vector<8xf32>
      %54 = vector.multi_reduction <add>, %53, %cst_39 [1] : vector<8x32xf32> to vector<8xf32>
      %55 = vector.shape_cast %54 : vector<8xf32> to vector<8x1xf32>
      %cst_40 = arith.constant 3.200000e+01 : f32
      %56 = vector.broadcast %cst_40 : f32 to vector<8x1xf32>
      %57 = arith.divf %55, %56 : vector<8x1xf32>
      %58 = vector.broadcast %57 : vector<8x1xf32> to vector<8x32xf32>
      %59 = arith.subf %53, %58 : vector<8x32xf32>
      %60 = arith.mulf %59, %59 : vector<8x32xf32>
      %cst_41 = arith.constant dense<0.000000e+00> : vector<8xf32>
      %61 = vector.multi_reduction <add>, %60, %cst_41 [1] : vector<8x32xf32> to vector<8xf32>
      %62 = vector.shape_cast %61 : vector<8xf32> to vector<8x1xf32>
      %cst_42 = arith.constant 3.200000e+01 : f32
      %63 = vector.broadcast %cst_42 : f32 to vector<8x1xf32>
      %64 = arith.divf %62, %63 : vector<8x1xf32>
      %cst_43 = arith.constant 9.99999974E-6 : f32
      %65 = vector.broadcast %cst_43 : f32 to vector<8x1xf32>
      %66 = arith.addf %64, %65 : vector<8x1xf32>
      %67 = math.rsqrt %66 : vector<8x1xf32>
      %68 = vector.broadcast %67 : vector<8x1xf32> to vector<8x32xf32>
      %69 = arith.mulf %59, %68 : vector<8x32xf32>
      %c0_44 = arith.constant 0 : index
      %c0_45 = arith.constant 0 : index
      %70 = vector.load %arg11[%c0_44, %c0_45] : memref<1x32xf32, #tpu.memory_space<vmem>>, vector<1x32xf32>
      %71 = vector.broadcast %70 : vector<1x32xf32> to vector<8x32xf32>
      %72 = arith.mulf %69, %71 : vector<8x32xf32>
      %c0_46 = arith.constant 0 : index
      %c0_47 = arith.constant 0 : index
      %73 = vector.load %arg12[%c0_46, %c0_47] : memref<1x32xf32, #tpu.memory_space<vmem>>, vector<1x32xf32>
      %74 = vector.broadcast %73 : vector<1x32xf32> to vector<8x32xf32>
      %75 = arith.addf %72, %74 : vector<8x32xf32>
      %c0_48 = arith.constant 0 : index
      %c0_49 = arith.constant 0 : index
      %76 = vector.load %arg16[%c0_48, %c0_49] : memref<8x32xf32, #tpu.memory_space<vmem>>, vector<8x32xf32>
      tpu.vector_store %arg16[%c0_48, %c0_49], %75 {strides = array<i32>} : memref<8x32xf32, #tpu.memory_space<vmem>>, vector<8x32xf32>,
      %cst_50 = arith.constant 0.000000e+00 : f32
      %77 = vector.broadcast %cst_50 : f32 to vector<8x32xf32>
      %c0_51 = arith.constant 0 : index
      %c0_52 = arith.constant 0 : index
      %78 = vector.load %arg17[%c0_51, %c0_52] : memref<8x32xf32, #tpu.memory_space<vmem>>, vector<8x32xf32>
      tpu.vector_store %arg17[%c0_51, %c0_52], %77 {strides = array<i32>} : memref<8x32xf32, #tpu.memory_space<vmem>>, vector<8x32xf32>,
    } else {
    }
    %c0 = arith.constant 0 : index
    %c0_1 = arith.constant 0 : index
    %3 = vector.load %arg16[%c0, %c0_1] : memref<8x32xf32, #tpu.memory_space<vmem>>, vector<8x32xf32>
    %4 = arith.truncf %3 : vector<8x32xf32> to vector<8x32xbf16>
    %c0_2 = arith.constant 0 : index
    %c0_3 = arith.constant 0 : index
    %5 = vector.load %arg7[%c0_2, %c0_3] : memref<32x64xbf16, #tpu.memory_space<vmem>>, vector<32x64xbf16>
    %cst = arith.constant dense<0.000000e+00> : vector<8x64xf32>
    %6 = tpu.matmul %4, %5, %cst {dimension_numbers = #tpu.dot_dimension_numbers<[1], [0], [0], [1], [0, 0, 1, 1], [], []>} : vector<8x32xbf16>, vector<32x64xbf16>, vector<8x64xf32> -> vector<8x64xf32>
    %c0_4 = arith.constant 0 : index
    %c0_5 = arith.constant 0 : index
    %7 = vector.load %arg8[%c0_4, %c0_5] : memref<1x64xf32, #tpu.memory_space<vmem>>, vector<1x64xf32>
    %8 = vector.broadcast %7 : vector<1x64xf32> to vector<8x64xf32>
    %9 = arith.addf %6, %8 : vector<8x64xf32>
    %cst_6 = arith.constant 0.000000e+00 : f32
    %10 = vector.broadcast %cst_6 : f32 to vector<8x64xf32>
    %11 = arith.maximumf %9, %10 : vector<8x64xf32>
    %c0_7 = arith.constant 0 : index
    %c0_8 = arith.constant 0 : index
    %12 = vector.load %arg17[%c0_7, %c0_8] : memref<8x32xf32, #tpu.memory_space<vmem>>, vector<8x32xf32>
    %13 = arith.truncf %11 : vector<8x64xf32> to vector<8x64xbf16>
    %c0_9 = arith.constant 0 : index
    %c0_10 = arith.constant 0 : index
    %14 = vector.load %arg9[%c0_9, %c0_10] : memref<64x32xbf16, #tpu.memory_space<vmem>>, vector<64x32xbf16>
    %cst_11 = arith.constant dense<0.000000e+00> : vector<8x32xf32>
    %15 = tpu.matmul %13, %14, %cst_11 {dimension_numbers = #tpu.dot_dimension_numbers<[1], [0], [0], [1], [0, 0, 1, 1], [], []>} : vector<8x64xbf16>, vector<64x32xbf16>, vector<8x32xf32> -> vector<8x32xf32>
    %16 = arith.addf %12, %15 : vector<8x32xf32>
    %c0_12 = arith.constant 0 : index
    %c0_13 = arith.constant 0 : index
    %17 = vector.load %arg17[%c0_12, %c0_13] : memref<8x32xf32, #tpu.memory_space<vmem>>, vector<8x32xf32>
    tpu.vector_store %arg17[%c0_12, %c0_13], %16 {strides = array<i32>} : memref<8x32xf32, #tpu.memory_space<vmem>>, vector<8x32xf32>,
    %c0_i32_14 = arith.constant 0 : i32
    %18 = arith.cmpi eq, %arg2, %c0_i32_14 : i32
    %19 = arith.extui %18 : i1 to i32
    %c0_i32_15 = arith.constant 0 : i32
    %20 = arith.cmpi ne, %19, %c0_i32_15 : i32
    scf.if %20 {
      %c0_16 = arith.constant 0 : index
      %c0_17 = arith.constant 0 : index
      %21 = vector.load %arg16[%c0_16, %c0_17] : memref<8x32xf32, #tpu.memory_space<vmem>>, vector<8x32xf32>
      %c0_18 = arith.constant 0 : index
      %c0_19 = arith.constant 0 : index
      %22 = vector.load %arg17[%c0_18, %c0_19] : memref<8x32xf32, #tpu.memory_space<vmem>>, vector<8x32xf32>
      %23 = arith.addf %21, %22 : vector<8x32xf32>
      %c0_20 = arith.constant 0 : index
      %c0_21 = arith.constant 0 : index
      %24 = vector.load %arg10[%c0_20, %c0_21] : memref<1x32xf32, #tpu.memory_space<vmem>>, vector<1x32xf32>
      %25 = vector.broadcast %24 : vector<1x32xf32> to vector<8x32xf32>
      %26 = arith.addf %23, %25 : vector<8x32xf32>
      %cst_22 = arith.constant dense<0.000000e+00> : vector<8xf32>
      %27 = vector.multi_reduction <add>, %26, %cst_22 [1] : vector<8x32xf32> to vector<8xf32>
      %28 = vector.shape_cast %27 : vector<8xf32> to vector<8x1xf32>
      %cst_23 = arith.constant 3.200000e+01 : f32
      %29 = vector.broadcast %cst_23 : f32 to vector<8x1xf32>
      %30 = arith.divf %28, %29 : vector<8x1xf32>
      %31 = vector.broadcast %30 : vector<8x1xf32> to vector<8x32xf32>
      %32 = arith.subf %26, %31 : vector<8x32xf32>
      %33 = arith.mulf %32, %32 : vector<8x32xf32>
      %cst_24 = arith.constant dense<0.000000e+00> : vector<8xf32>
      %34 = vector.multi_reduction <add>, %33, %cst_24 [1] : vector<8x32xf32> to vector<8xf32>
      %35 = vector.shape_cast %34 : vector<8xf32> to vector<8x1xf32>
      %cst_25 = arith.constant 3.200000e+01 : f32
      %36 = vector.broadcast %cst_25 : f32 to vector<8x1xf32>
      %37 = arith.divf %35, %36 : vector<8x1xf32>
      %cst_26 = arith.constant 9.99999974E-6 : f32
      %38 = vector.broadcast %cst_26 : f32 to vector<8x1xf32>
      %39 = arith.addf %37, %38 : vector<8x1xf32>
      %40 = math.rsqrt %39 : vector<8x1xf32>
      %41 = vector.broadcast %40 : vector<8x1xf32> to vector<8x32xf32>
      %42 = arith.mulf %32, %41 : vector<8x32xf32>
      %c0_27 = arith.constant 0 : index
      %c0_28 = arith.constant 0 : index
      %43 = vector.load %arg13[%c0_27, %c0_28] : memref<1x32xf32, #tpu.memory_space<vmem>>, vector<1x32xf32>
      %44 = vector.broadcast %43 : vector<1x32xf32> to vector<8x32xf32>
      %45 = arith.mulf %42, %44 : vector<8x32xf32>
      %c0_29 = arith.constant 0 : index
      %c0_30 = arith.constant 0 : index
      %46 = vector.load %arg14[%c0_29, %c0_30] : memref<1x32xf32, #tpu.memory_space<vmem>>, vector<1x32xf32>
      %47 = vector.broadcast %46 : vector<1x32xf32> to vector<8x32xf32>
      %48 = arith.addf %45, %47 : vector<8x32xf32>
      %c0_31 = arith.constant 0 : index
      %c0_32 = arith.constant 0 : index
      %c0_33 = arith.constant 0 : index
      %49 = vector.load %arg15[%c0_31, %c0_32, %c0_33] : memref<1x8x32xf32, #tpu.memory_space<vmem>>, vector<1x8x32xf32>
      %50 = vector.shape_cast %49 : vector<1x8x32xf32> to vector<8x32xf32>
      %51 = vector.shape_cast %48 : vector<8x32xf32> to vector<1x8x32xf32>
      tpu.vector_store %arg15[%c0_31, %c0_32, %c0_33], %51 {strides = array<i32>} : memref<1x8x32xf32, #tpu.memory_space<vmem>>, vector<1x8x32xf32>,
    } else {
    }
    return
  }
  func.func @transform_0(%arg0: i32, %arg1: i32, %arg2: i32) -> (i32, i32, i32) {
    %c0_i32 = arith.constant 0 : i32
    %c0_i32_0 = arith.constant 0 : i32
    return %arg0, %arg1, %c0_i32 : i32, i32, i32
  }
  func.func @transform_1(%arg0: i32, %arg1: i32, %arg2: i32) -> (i32, i32, i32, i32) {
    %c0_i32 = arith.constant 0 : i32
    %c0_i32_0 = arith.constant 0 : i32
    %c0_i32_1 = arith.constant 0 : i32
    return %arg0, %c0_i32, %arg1, %c0_i32_0 : i32, i32, i32, i32
  }
  func.func @transform_2(%arg0: i32, %arg1: i32, %arg2: i32) -> (i32, i32, i32) {
    %c0_i32 = arith.constant 0 : i32
    %c0_i32_0 = arith.constant 0 : i32
    %c0_i32_1 = arith.constant 0 : i32
    %c0_i32_2 = arith.constant 0 : i32
    return %c0_i32, %c0_i32_0, %c0_i32_1 : i32, i32, i32
  }
  func.func @transform_3(%arg0: i32, %arg1: i32, %arg2: i32) -> (i32, i32) {
    %c0_i32 = arith.constant 0 : i32
    %c0_i32_0 = arith.constant 0 : i32
    %c0_i32_1 = arith.constant 0 : i32
    return %c0_i32, %c0_i32_0 : i32, i32
  }
  func.func @transform_4(%arg0: i32, %arg1: i32, %arg2: i32) -> (i32, i32) {
    %c0_i32 = arith.constant 0 : i32
    %c0_i32_0 = arith.constant 0 : i32
    return %c0_i32, %arg2 : i32, i32
  }
  func.func @transform_5(%arg0: i32, %arg1: i32, %arg2: i32) -> (i32, i32) {
    %c0_i32 = arith.constant 0 : i32
    %c0_i32_0 = arith.constant 0 : i32
    return %c0_i32, %arg2 : i32, i32
  }
  func.func @transform_6(%arg0: i32, %arg1: i32, %arg2: i32) -> (i32, i32) {
    %c0_i32 = arith.constant 0 : i32
    %c0_i32_0 = arith.constant 0 : i32
    return %arg2, %c0_i32 : i32, i32
  }
  func.func @transform_7(%arg0: i32, %arg1: i32, %arg2: i32) -> (i32, i32) {
    %c0_i32 = arith.constant 0 : i32
    %c0_i32_0 = arith.constant 0 : i32
    %c0_i32_1 = arith.constant 0 : i32
    return %c0_i32, %c0_i32_0 : i32, i32
  }
  func.func @transform_8(%arg0: i32, %arg1: i32, %arg2: i32) -> (i32, i32) {
    %c0_i32 = arith.constant 0 : i32
    %c0_i32_0 = arith.constant 0 : i32
    %c0_i32_1 = arith.constant 0 : i32
    return %c0_i32, %c0_i32_0 : i32, i32
  }
  func.func @transform_9(%arg0: i32, %arg1: i32, %arg2: i32) -> (i32, i32) {
    %c0_i32 = arith.constant 0 : i32
    %c0_i32_0 = arith.constant 0 : i32
    %c0_i32_1 = arith.constant 0 : i32
    return %c0_i32, %c0_i32_0 : i32, i32
  }
  func.func @transform_10(%arg0: i32, %arg1: i32, %arg2: i32) -> (i32, i32) {
    %c0_i32 = arith.constant 0 : i32
    %c0_i32_0 = arith.constant 0 : i32
    %c0_i32_1 = arith.constant 0 : i32
    return %c0_i32, %c0_i32_0 : i32, i32
  }
  func.func @transform_11(%arg0: i32, %arg1: i32, %arg2: i32) -> (i32, i32) {
    %c0_i32 = arith.constant 0 : i32
    %c0_i32_0 = arith.constant 0 : i32
    %c0_i32_1 = arith.constant 0 : i32
    return %c0_i32, %c0_i32_0 : i32, i32
  }
  func.func @transform_12(%arg0: i32, %arg1: i32, %arg2: i32) -> (i32, i32, i32) {
    %c0_i32 = arith.constant 0 : i32
    %c0_i32_0 = arith.constant 0 : i32
    return %arg0, %arg1, %c0_i32 : i32, i32, i32
  }
}

</mosaic_0001>

<llo_original>
// kernel: transformer_encoder.6
$region0: #{transformer_encoder.6}
  #allocation0 [shape = 'u32[]', space=smem, size = 0x4, offset = 0x4, fixed_abs, tag = 'smem constant byte address 0x4 - core index']
  #allocation1 [shape = 'u32[144,128]{1,0:T(1,128)}', space=vmem, size = 0x12000, scoped, tag = 'internal scratch']
  %s0 = inlined_call_operand.vmem [shape: f32[2,8,32], index: 0, kind: input, shape index: {}]
  %s1 = inlined_call_operand.vmem [shape: bf16[32,96], index: 1, kind: input, shape index: {}]
  %s2 = inlined_call_operand.vmem [shape: f32[1,96], index: 2, kind: input, shape index: {}]
  %s3 = inlined_call_operand.vmem [shape: bf16[2,4,8,8], index: 3, kind: output, shape index: {0}]
  %s4 = inlined_call_operand.vmem [shape: bf16[2,4,8,8], index: 4, kind: output, shape index: {1}]
  %s5 = inlined_call_operand.vmem [shape: bf16[2,4,8,8], index: 5, kind: output, shape index: {2}]
  %6 = xla_tuple %s3, %s4, %s5
  %s7 = sld [smem:[#allocation0]]
  $region61: #{transformer_encoder.6} parent=0
    _
  %s9 = ssub.s32 1, %s7
  %s10 = scalar_select 0, %s9, %s7
  loop: start=0, step=1, limit=4
  $region2: #{transformer_encoder.6} parent=0 // loop_pre_header
    _
  $region3: #{transformer_encoder.6} parent=0 // loop_header
    %s12 = sphi 0, %s16
    %p13 = scmp.ge.s32.totalorder %s12, 4
    %s19 = sphi 0, %s31
    %s20 = sphi 0, %s27
    %s21 = sphi 0, %s19
    %s22 = sphi 0, %s20
    %s23 = sphi 0, %s21
    %s24 = sphi 0, %s22
    %s36 = sphi 0, %s38
    %s39 = sphi 0, %s36
    %s40 = sphi 0, %s39
    %s56 = sphi 0, %s40
    %s60 = sphi 0, %s60
    %s62 = sphi 0, %s60
    %s63 = sphi 0, %s62
    %s77 = sphi 0, %s63
    %s81 = sphi 0, %s81
    %s83 = sphi 0, %s81
    %s84 = sphi 0, %s83
    %s98 = sphi 0, %s84
    %s106 = sphi 0, %s108
    %s109 = sphi 0, %s106
    %s110 = sphi 0, %s109
    %s126 = sphi 0, %s110
    %s134 = sphi 0, %s136
    %s137 = sphi 0, %s134
    %s138 = sphi 0, %s137
    %s154 = sphi 0, %s138
    %s162 = sphi 0, %s164
    %s165 = sphi 0, %s162
    %s166 = sphi 0, %s165
    %s182 = sphi 0, %s166
  $region4: #{transformer_encoder.6} parent=0 // loop_header_branch
    %15 = sbr.rel (%p13) target = $region8
  $region5: #{transformer_encoder.6} parent=0 // loop_body
    %s17 = ssub.s32 %s12, 1
    %s18 = ssub.s32 %s12, 2
    %s25 = sadd.s32 1, %s20
    %p26 = scmp.ge.s32.totalorder %s25, 1
    %s27 = scalar_select %p26, 0, %s25
    %s28 = sadd.s32 1, %s19
    %s29 = scalar_select %p26, %s28, %s19
    %p30 = scmp.ge.s32.totalorder %s29, 2
    %s31 = scalar_select %p30, 0, %s29
    %s32 = ssub.s32 %s19, %s31
    %s33 = ssub.s32 %s20, %s27
    %s34 = sor.u32 %s32, %s33
    %p35 = scmp.eq.s32.totalorder %s34, 0
    %s37 = sadd.s32 %s36, 1
    %s38 = scalar_select %p35, %s36, %s37
    %p41 = pneg %p35
    %p42 = scmp.eq.s32.totalorder %s12, 1
    %p43 = por %p41, %p42
    %p44 = scmp.ne.s32.totalorder %s36, %s39
    %p45 = scmp.eq.s32.totalorder %s12, 0
    %p46 = por %p44, %p45
    %p47 = scmp.ne.s32.totalorder %s36, %s39
    %p48 = scmp.eq.s32.totalorder %s17, 1
    %p49 = por %p47, %p48
    %p50 = scmp.ne.s32.totalorder %s39, %s40
    %p51 = scmp.eq.s32.totalorder %s17, 0
    %p52 = por %p50, %p51
    %p53 = scmp.ne.s32.totalorder %s39, %s40
    %p54 = scmp.eq.s32.totalorder %s18, 1
    %p55 = por %p53, %p54
    %p57 = scmp.ne.s32.totalorder %s40, %s56
    %p58 = scmp.eq.s32.totalorder %s18, 0
    %p59 = por %p57, %p58
    %s61 = sadd.s32 %s60, 1
    %p64 = scmp.eq.s32.totalorder %s12, 1
    %p65 = scmp.ne.s32.totalorder %s60, %s62
    %p66 = scmp.eq.s32.totalorder %s12, 0
    %p67 = por %p65, %p66
    %p68 = scmp.ne.s32.totalorder %s60, %s62
    %p69 = scmp.eq.s32.totalorder %s17, 1
    %p70 = por %p68, %p69
    %p71 = scmp.ne.s32.totalorder %s62, %s63
    %p72 = scmp.eq.s32.totalorder %s17, 0
    %p73 = por %p71, %p72
    %p74 = scmp.ne.s32.totalorder %s62, %s63
    %p75 = scmp.eq.s32.totalorder %s18, 1
    %p76 = por %p74, %p75
    %p78 = scmp.ne.s32.totalorder %s63, %s77
    %p79 = scmp.eq.s32.totalorder %s18, 0
    %p80 = por %p78, %p79
    %s82 = sadd.s32 %s81, 1
    %p85 = scmp.eq.s32.totalorder %s12, 1
    %p86 = scmp.ne.s32.totalorder %s81, %s83
    %p87 = scmp.eq.s32.totalorder %s12, 0
    %p88 = por %p86, %p87
    %p89 = scmp.ne.s32.totalorder %s81, %s83
    %p90 = scmp.eq.s32.totalorder %s17, 1
    %p91 = por %p89, %p90
    %p92 = scmp.ne.s32.totalorder %s83, %s84
    %p93 = scmp.eq.s32.totalorder %s17, 0
    %p94 = por %p92, %p93
    %p95 = scmp.ne.s32.totalorder %s83, %s84
    %p96 = scmp.eq.s32.totalorder %s18, 1
    %p97 = por %p95, %p96
    %p99 = scmp.ne.s32.totalorder %s84, %s98
    %p100 = scmp.eq.s32.totalorder %s18, 0
    %p101 = por %p99, %p100
    %s102 = ssub.s32 %s19, %s31
    %s103 = ssub.s32 %s20, %s27
    %s104 = sor.u32 %s102, %s103
    %p105 = scmp.eq.s32.totalorder %s104, 0
    %s107 = sadd.s32 %s106, 1
    %s108 = scalar_select %p105, %s106, %s107
    %p111 = pneg %p105
    %p112 = scmp.eq.s32.totalorder %s12, 1
    %p113 = por %p111, %p112
    %p114 = scmp.ne.s32.totalorder %s106, %s109
    %p115 = scmp.eq.s32.totalorder %s12, 0
    %p116 = por %p114, %p115
    %p117 = scmp.ne.s32.totalorder %s106, %s109
    %p118 = scmp.eq.s32.totalorder %s17, 1
    %p119 = por %p117, %p118
    %p120 = scmp.ne.s32.totalorder %s109, %s110
    %p121 = scmp.eq.s32.totalorder %s17, 0
    %p122 = por %p120, %p121
    %p123 = scmp.ne.s32.totalorder %s109, %s110
    %p124 = scmp.eq.s32.totalorder %s18, 1
    %p125 = por %p123, %p124
    %p127 = scmp.ne.s32.totalorder %s110, %s126
    %p128 = scmp.eq.s32.totalorder %s18, 0
    %p129 = por %p127, %p128
    %s130 = ssub.s32 %s19, %s31
    %s131 = ssub.s32 %s20, %s27
    %s132 = sor.u32 %s130, %s131
    %p133 = scmp.eq.s32.totalorder %s132, 0
    %s135 = sadd.s32 %s134, 1
    %s136 = scalar_select %p133, %s134, %s135
    %p139 = pneg %p133
    %p140 = scmp.eq.s32.totalorder %s12, 1
    %p141 = por %p139, %p140
    %p142 = scmp.ne.s32.totalorder %s134, %s137
    %p143 = scmp.eq.s32.totalorder %s12, 0
    %p144 = por %p142, %p143
    %p145 = scmp.ne.s32.totalorder %s134, %s137
    %p146 = scmp.eq.s32.totalorder %s17, 1
    %p147 = por %p145, %p146
    %p148 = scmp.ne.s32.totalorder %s137, %s138
    %p149 = scmp.eq.s32.totalorder %s17, 0
    %p150 = por %p148, %p149
    %p151 = scmp.ne.s32.totalorder %s137, %s138
    %p152 = scmp.eq.s32.totalorder %s18, 1
    %p153 = por %p151, %p152
    %p155 = scmp.ne.s32.totalorder %s138, %s154
    %p156 = scmp.eq.s32.totalorder %s18, 0
    %p157 = por %p155, %p156
    %s158 = ssub.s32 %s19, %s31
    %s159 = ssub.s32 %s20, %s27
    %s160 = sor.u32 %s158, %s159
    %p161 = scmp.eq.s32.totalorder %s160, 0
    %s163 = sadd.s32 %s162, 1
    %s164 = scalar_select %p161, %s162, %s163
    %p167 = pneg %p161
    %p168 = scmp.eq.s32.totalorder %s12, 1
    %p169 = por %p167, %p168
    %p170 = scmp.ne.s32.totalorder %s162, %s165
    %p171 = scmp.eq.s32.totalorder %s12, 0
    %p172 = por %p170, %p171
    %p173 = scmp.ne.s32.totalorder %s162, %s165
    %p174 = scmp.eq.s32.totalorder %s17, 1
    %p175 = por %p173, %p174
    %p176 = scmp.ne.s32.totalorder %s165, %s166
    %p177 = scmp.eq.s32.totalorder %s17, 0
    %p178 = por %p176, %p177
    %p179 = scmp.ne.s32.totalorder %s165, %s166
    %p180 = scmp.eq.s32.totalorder %s18, 1
    %p181 = por %p179, %p180
    %p183 = scmp.ne.s32.totalorder %s166, %s182
    %p184 = scmp.eq.s32.totalorder %s18, 0
    %p185 = por %p183, %p184
    %p186 = scmp.le.s32.totalorder 1, %s12
    %p187 = scmp.lt.s32.totalorder %s12, 3
    %p188 = pnand %p186, %p187
    %p189 = pneg %p188
    // Predicated region
    $region9: #{transformer_encoder.6} parent=5 // pred_check
      _
    $region10: #{transformer_encoder.6} parent=5 // pred_check_branch
      %191 = sbr.rel (%p188) target = $region12
    $region11: #{transformer_encoder.6} parent=5 // pred_region
      %s192 = ssub.s32 %s12, 1
      // Predicated region
      $region13: #{transformer_encoder.6} parent=11 // pred_check
        %p193 = pneg %p73
      $region14: #{transformer_encoder.6} parent=11 // pred_check_branch
        %195 = sbr.rel (%p193) target = $region16
      $region15: #{transformer_encoder.6} parent=11 // pred_region
        _
      $region16: #{transformer_encoder.6} parent=11 // pred_fallthru
        _
      // Predicated region
      $region17: #{transformer_encoder.6} parent=11 // pred_check
        %p196 = pneg %p94
      $region18: #{transformer_encoder.6} parent=11 // pred_check_branch
        %198 = sbr.rel (%p196) target = $region20
      $region19: #{transformer_encoder.6} parent=11 // pred_region
        _
      $region20: #{transformer_encoder.6} parent=11 // pred_fallthru
        _
    $region12: #{transformer_encoder.6} parent=5 // pred_fallthru
      _
    %p199 = scmp.lt.s32.totalorder %s12, 2
    // Predicated region
    $region21: #{transformer_encoder.6} parent=5 // pred_check
      %p200 = pneg %p199
    $region22: #{transformer_encoder.6} parent=5 // pred_check_branch
      %202 = sbr.rel (%p200) target = $region24
    $region23: #{transformer_encoder.6} parent=5 // pred_region
      // Predicated region
      $region25: #{transformer_encoder.6} parent=23 // pred_check
        %p203 = pneg %p46
      $region26: #{transformer_encoder.6} parent=23 // pred_check_branch
        %205 = sbr.rel (%p203) target = $region28
      $region27: #{transformer_encoder.6} parent=23 // pred_region
        %p206 = scmp.lt.s32.totalorder %s19, 1
        %s207 = scalar_select %p206, %s19, 1
        %p208 = scmp.lt.s32.totalorder %s20, 0
        %s209 = scalar_select %p208, %s20, 0
        %s210 = sadd.s32 %s209, %s207
        %s211 = smul.addr %s210, 8
        %s212 = scalar_lea.vmem %s0, %s211
      $region28: #{transformer_encoder.6} parent=23 // pred_fallthru
        _
    $region24: #{transformer_encoder.6} parent=5 // pred_fallthru
      _
    %p213 = scmp.le.s32.totalorder 1, %s12
    %p214 = scmp.lt.s32.totalorder %s12, 3
    %p215 = pnand %p213, %p214
    %p216 = pneg %p215
    // Predicated region
    $region29: #{transformer_encoder.6} parent=5 // pred_check
      _
    $region30: #{transformer_encoder.6} parent=5 // pred_check_branch
      %218 = sbr.rel (%p215) target = $region32
    $region31: #{transformer_encoder.6} parent=5 // pred_region
      %s219 = ssub.s32 %s12, 1
      %p220 = scmp.lt.s32.totalorder %s21, 1
      %s221 = scalar_select %p220, %s21, 1
      %p222 = scmp.lt.s32.totalorder %s22, 0
      %s223 = scalar_select %p222, %s22, 0
      %s224 = sadd.s32 %s223, %s221
      %s225 = smul.addr %s224, 8
      %s226 = scalar_lea.vmem %s0, %s225
      %p227 = pneg %p52
      %p228 = pneg %p49
      %p229 = pneg %p73
      %p230 = pneg %p70
      %p231 = pneg %p94
      %p232 = pneg %p91
      %p233 = pneg %p122
      %p234 = pneg %p119
      %p235 = scmp.lt.s32.totalorder %s21, 1
      %s236 = scalar_select %p235, %s21, 1
      %p237 = scmp.lt.s32.totalorder %s22, 0
      %s238 = scalar_select %p237, %s22, 0
      %s239 = smul.addr %s236, 4
      %s240 = sadd.s32 %s238, %s239
      %s241 = smul.addr %s240, 4
      %s242 = scalar_lea.vmem %s3, %s241
      %p243 = pneg %p150
      %p244 = pneg %p147
      %p245 = scmp.lt.s32.totalorder %s21, 1
      %s246 = scalar_select %p245, %s21, 1
      %p247 = scmp.lt.s32.totalorder %s22, 0
      %s248 = scalar_select %p247, %s22, 0
      %s249 = smul.addr %s246, 4
      %s250 = sadd.s32 %s248, %s249
      %s251 = smul.addr %s250, 4
      %s252 = scalar_lea.vmem %s4, %s251
      %p253 = pneg %p178
      %p254 = pneg %p175
      %p255 = scmp.lt.s32.totalorder %s21, 1
      %s256 = scalar_select %p255, %s21, 1
      %p257 = scmp.lt.s32.totalorder %s22, 0
      %s258 = scalar_select %p257, %s22, 0
      %s259 = smul.addr %s256, 4
      %s260 = sadd.s32 %s258, %s259
      %s261 = smul.addr %s260, 4
      %s262 = scalar_lea.vmem %s5, %s261
      %p263 = scmp.lt.s32.totalorder %s21, 1
      %s264 = scalar_select %p263, %s21, 1
      %p265 = scmp.lt.s32.totalorder %s22, 0
      %s266 = scalar_select %p265, %s22, 0
      %s267 = sadd.s32 %s266, %s264
      %s268 = smul.addr %s267, 8
      %s269 = scalar_lea.vmem %s0, %s268
      %p270 = scmp.lt.s32.totalorder %s21, 1
      %s271 = scalar_select %p270, %s21, 1
      %p272 = scmp.lt.s32.totalorder %s22, 0
      %s273 = scalar_select %p272, %s22, 0
      %s274 = smul.addr %s271, 4
      %s275 = sadd.s32 %s273, %s274
      %s276 = smul.addr %s275, 4
      %s277 = scalar_lea.vmem %s3, %s276
      %p278 = scmp.lt.s32.totalorder %s21, 1
      %s279 = scalar_select %p278, %s21, 1
      %p280 = scmp.lt.s32.totalorder %s22, 0
      %s281 = scalar_select %p280, %s22, 0
      %s282 = smul.addr %s279, 4
      %s283 = sadd.s32 %s281, %s282
      %s284 = smul.addr %s283, 4
      %s285 = scalar_lea.vmem %s4, %s284
      %p286 = scmp.lt.s32.totalorder %s21, 1
      %s287 = scalar_select %p286, %s21, 1
      %p288 = scmp.lt.s32.totalorder %s22, 0
      %s289 = scalar_select %p288, %s22, 0
      %s290 = smul.addr %s287, 4
      %s291 = sadd.s32 %s289, %s290
      %s292 = smul.addr %s291, 4
      %s293 = scalar_lea.vmem %s5, %s292
      %v295 = vld [vmem:[%s269] sm:$0xff]
      %v296 = vpack.c.bf16 %v295, %v295
      %v297 = vld [vmem:[%s1] sm:$0xf]
      %v298 = vld [vmem:[%s1 + $0x4] sm:$0xf]
      %v299 = vld [vmem:[%s1 + $0x8] sm:$0xf]
      %v300 = vld [vmem:[%s1 + $0xc] sm:$0xf]
      %v301 = vld [vmem:[%s2] sm:$0x1]
      %v303 = vlaneseq
      %v304 = vshrl.u32 %v303, 7
      %v305 = vsub.s32 0, %v304
      %v306 = vrot.slane %v301, %v305
      %v312 = vunpack.c.l.b16 %v297
      %v313 = vunpack.c.l.b16 %v298
      %v314 = vunpack.c.l.b16 %v299
      %v315 = vunpack.c.l.b16 %v300
      %v316 = vpack.c.b16 %v313, %v312
      %v317 = vpack.c.b16 %v315, %v314
      %vm320 = vcmask 261120
      %v322 = vsel %vm320, %v296, 0
      %324 = vmatprep.subr.bf16.mxu0 0
      %325 = vmatpush1.bf16.msra.mxu0 0
      %326 = vmatprep.subr.bf16.mxu0 0
      %327 = vmatpush1.bf16.msra.mxu0 0
      %328 = vmatprep.subr.bf16.mxu0 0
      %329 = vmatpush1.bf16.msra.mxu0 0
      %330 = vmatprep.subr.bf16.mxu0 0
      %331 = vmatpush1.bf16.msra.mxu0 0
      %332 = vmatprep.subr.bf16.mxu0 0
      %333 = vmatpush1.bf16.msra.mxu0 0
      %334 = vmatprep.subr.bf16.mxu0 0
      %335 = vmatpush1.bf16.msra.mxu0 0
      %336 = vmatprep.subr.bf16.mxu0 0
      %337 = vmatpush1.bf16.msra.mxu0 %v317
      %338 = vmatprep.subr.bf16.mxu0 0
      %339 = vmatpush1.bf16.msra.mxu0 %v316
      %340 = vmatprep.subr.bf16.mxu0 0
      %341 = vmatpush2.bf16.msra.mxu0 0
      %342 = vmatprep.subr.bf16.mxu0 0
      %343 = vmatpush2.bf16.msra.mxu0 0
      %344 = vmatprep.subr.bf16.mxu0 0
      %345 = vmatpush2.bf16.msra.mxu0 0
      %346 = vmatprep.subr.bf16.mxu0 0
      %347 = vmatpush2.bf16.msra.mxu0 0
      %348 = vmatprep.subr.bf16.mxu0 0
      %349 = vmatpush2.bf16.msra.mxu0 0
      %350 = vmatprep.subr.bf16.mxu0 0
      %351 = vmatpush2.bf16.msra.mxu0 0
      %352 = vmatprep.subr.bf16.mxu0 0
      %353 = vmatpush2.bf16.msra.mxu0 0
      %354 = vmatprep.subr.bf16.mxu0 0
      %355 = vmatpush2.bf16.msra.mxu0 0
      %356 = vmatprep.mubr.bf16.mxu0 0
      %357 = vmatmul.mubr.bf16.gmra.mxu0 %v322
      %v358 = vpop.f32.mrf.mxu0
      %v359 = vadd.f32 %v306, %v358
      %v360 = vpop.f32.mrf.mxu0
      %v361 = vpop.f32.mrf.mxu0
      %v362 = vpop.f32.mrf.mxu0
      %363 = vdwg.mxu0
      %v364 = vpack.c.bf16 %v359, %v359
      %vm365 = vcmask 60416
      %366 = vst.msk [vmem:[%s277] sm:$0xf] %vm365, %v364
      %v368 = vunpack.c.l.b16 %v364
      %v369 = vpack.c.b16 %v368, %v368
      %370 = vrot.lane.b32.xlu0 %v369, 96
      %v371 = vpop.permute.xlu0 %370
      %373 = vst.msk [vmem:[%s285] sm:$0xf] %vm365, %v371
      %374 = vrot.lane.b32.xlu0 %v369, 64
      %v375 = vpop.permute.xlu0 %374
      %377 = vst.msk [vmem:[%s293] sm:$0xf] %vm365, %v375
      %378 = vrot.lane.b32.xlu0 %v369, 120
      %v379 = vpop.permute.xlu0 %378
      %s381 = scalar_lea.vmem %s277, 4
      %382 = vst.msk [vmem:[%s381] sm:$0xf] %vm365, %v379
      %383 = vrot.lane.b32.xlu0 %v369, 88
      %v384 = vpop.permute.xlu0 %383
      %s386 = scalar_lea.vmem %s285, 4
      %387 = vst.msk [vmem:[%s386] sm:$0xf] %vm365, %v384
      %388 = vrot.lane.b32.xlu0 %v369, 56
      %v389 = vpop.permute.xlu0 %388
      %s391 = scalar_lea.vmem %s293, 4
      %392 = vst.msk [vmem:[%s391] sm:$0xf] %vm365, %v389
      %393 = vrot.lane.b32.xlu0 %v369, 112
      %v394 = vpop.permute.xlu0 %393
      %s396 = scalar_lea.vmem %s277, 8
      %397 = vst.msk [vmem:[%s396] sm:$0xf] %vm365, %v394
      %398 = vrot.lane.b32.xlu0 %v369, 80
      %v399 = vpop.permute.xlu0 %398
      %s401 = scalar_lea.vmem %s285, 8
      %402 = vst.msk [vmem:[%s401] sm:$0xf] %vm365, %v399
      %403 = vrot.lane.b32.xlu0 %v369, 48
      %v404 = vpop.permute.xlu0 %403
      %s406 = scalar_lea.vmem %s293, 8
      %407 = vst.msk [vmem:[%s406] sm:$0xf] %vm365, %v404
      %408 = vrot.lane.b32.xlu0 %v369, 104
      %v409 = vpop.permute.xlu0 %408
      %s411 = scalar_lea.vmem %s277, 12
      %412 = vst.msk [vmem:[%s411] sm:$0xf] %vm365, %v409
      %413 = vrot.lane.b32.xlu0 %v369, 72
      %v414 = vpop.permute.xlu0 %413
      %s416 = scalar_lea.vmem %s285, 12
      %417 = vst.msk [vmem:[%s416] sm:$0xf] %vm365, %v414
      %418 = vrot.lane.b32.xlu0 %v369, 40
      %v419 = vpop.permute.xlu0 %418
      %s421 = scalar_lea.vmem %s293, 12
      %422 = vst.msk [vmem:[%s421] sm:$0xf] %vm365, %v419
      %p423 = scmp.lt.s32.totalorder %s21, 1
      %s424 = scalar_select %p423, %s21, 1
      %p425 = scmp.lt.s32.totalorder %s22, 0
      %s426 = scalar_select %p425, %s22, 0
      %s427 = smul.addr %s424, 4
      %s428 = sadd.s32 %s426, %s427
      %s429 = smul.addr %s428, 4
      %s430 = scalar_lea.vmem %s3, %s429
      %p431 = scmp.lt.s32.totalorder %s21, 1
      %s432 = scalar_select %p431, %s21, 1
      %p433 = scmp.lt.s32.totalorder %s22, 0
      %s434 = scalar_select %p433, %s22, 0
      %s435 = smul.addr %s432, 4
      %s436 = sadd.s32 %s434, %s435
      %s437 = smul.addr %s436, 4
      %s438 = scalar_lea.vmem %s4, %s437
      %p439 = scmp.lt.s32.totalorder %s21, 1
      %s440 = scalar_select %p439, %s21, 1
      %p441 = scmp.lt.s32.totalorder %s22, 0
      %s442 = scalar_select %p441, %s22, 0
      %s443 = smul.addr %s440, 4
      %s444 = sadd.s32 %s442, %s443
      %s445 = smul.addr %s444, 4
      %s446 = scalar_lea.vmem %s5, %s445
      // Predicated region
      $region33: #{transformer_encoder.6} parent=31 // pred_check
        %p447 = pneg %p119
      $region34: #{transformer_encoder.6} parent=31 // pred_check_branch
        %449 = sbr.rel (%p447) target = $region36
      $region35: #{transformer_encoder.6} parent=31 // pred_region
        _
      $region36: #{transformer_encoder.6} parent=31 // pred_fallthru
        _
      // Predicated region
      $region37: #{transformer_encoder.6} parent=31 // pred_check
        %p450 = pneg %p147
      $region38: #{transformer_encoder.6} parent=31 // pred_check_branch
        %452 = sbr.rel (%p450) target = $region40
      $region39: #{transformer_encoder.6} parent=31 // pred_region
        _
      $region40: #{transformer_encoder.6} parent=31 // pred_fallthru
        _
      // Predicated region
      $region41: #{transformer_encoder.6} parent=31 // pred_check
        %p453 = pneg %p175
      $region42: #{transformer_encoder.6} parent=31 // pred_check_branch
        %455 = sbr.rel (%p453) target = $region44
      $region43: #{transformer_encoder.6} parent=31 // pred_region
        _
      $region44: #{transformer_encoder.6} parent=31 // pred_fallthru
        _
    $region32: #{transformer_encoder.6} parent=5 // pred_fallthru
      _
    %p456 = scmp.le.s32.totalorder 2, %s12
    // Predicated region
    $region45: #{transformer_encoder.6} parent=5 // pred_check
      %p457 = pneg %p456
    $region46: #{transformer_encoder.6} parent=5 // pred_check_branch
      %459 = sbr.rel (%p457) target = $region48
    $region47: #{transformer_encoder.6} parent=5 // pred_region
      %s460 = ssub.s32 %s12, 2
      // Predicated region
      $region49: #{transformer_encoder.6} parent=47 // pred_check
        %p461 = pneg %p125
      $region50: #{transformer_encoder.6} parent=47 // pred_check_branch
        %463 = sbr.rel (%p461) target = $region52
      $region51: #{transformer_encoder.6} parent=47 // pred_region
        %p464 = scmp.lt.s32.totalorder %s23, 1
        %s465 = scalar_select %p464, %s23, 1
        %p466 = scmp.lt.s32.totalorder %s24, 0
        %s467 = scalar_select %p466, %s24, 0
        %s468 = smul.addr %s465, 4
        %s469 = sadd.s32 %s467, %s468
        %s470 = smul.addr %s469, 4
        %s471 = scalar_lea.vmem %s3, %s470
      $region52: #{transformer_encoder.6} parent=47 // pred_fallthru
        _
      // Predicated region
      $region53: #{transformer_encoder.6} parent=47 // pred_check
        %p472 = pneg %p153
      $region54: #{transformer_encoder.6} parent=47 // pred_check_branch
        %474 = sbr.rel (%p472) target = $region56
      $region55: #{transformer_encoder.6} parent=47 // pred_region
        %p475 = scmp.lt.s32.totalorder %s23, 1
        %s476 = scalar_select %p475, %s23, 1
        %p477 = scmp.lt.s32.totalorder %s24, 0
        %s478 = scalar_select %p477, %s24, 0
        %s479 = smul.addr %s476, 4
        %s480 = sadd.s32 %s478, %s479
        %s481 = smul.addr %s480, 4
        %s482 = scalar_lea.vmem %s4, %s481
      $region56: #{transformer_encoder.6} parent=47 // pred_fallthru
        _
      // Predicated region
      $region57: #{transformer_encoder.6} parent=47 // pred_check
        %p483 = pneg %p181
      $region58: #{transformer_encoder.6} parent=47 // pred_check_branch
        %485 = sbr.rel (%p483) target = $region60
      $region59: #{transformer_encoder.6} parent=47 // pred_region
        %p486 = scmp.lt.s32.totalorder %s23, 1
        %s487 = scalar_select %p486, %s23, 1
        %p488 = scmp.lt.s32.totalorder %s24, 0
        %s489 = scalar_select %p488, %s24, 0
        %s490 = smul.addr %s487, 4
        %s491 = sadd.s32 %s489, %s490
        %s492 = smul.addr %s491, 4
        %s493 = scalar_lea.vmem %s5, %s492
      $region60: #{transformer_encoder.6} parent=47 // pred_fallthru
        _
    $region48: #{transformer_encoder.6} parent=5 // pred_fallthru
      _
  $region6: #{transformer_encoder.6} parent=0 // loop_footer
    %s16 = sadd.s32 1, %s12
  $region7: #{transformer_encoder.6} parent=0 // loop_footer_branch
    %11 = sbr.rel target = $region3
  $region8: #{transformer_encoder.6} parent=0 // loop_exit
    _

// kernel: transformer_encoder.7
$region0: #{transformer_encoder.7}
  #allocation0 [shape = 'u32[]', space=smem, size = 0x4, offset = 0x4, fixed_abs, tag = 'smem constant byte address 0x4 - core index']
  #allocation1 [shape = 'u32[144,128]{1,0:T(1,128)}', space=vmem, size = 0x12000, scoped, tag = 'internal scratch']
  #allocation2 [shape = 'f32[8,1]{1,0:T(8,128)}', space=vmem, size = 0x1000, scoped, tag = 'scratch operand']
  #allocation3 [shape = 'f32[8,1]{1,0:T(8,128)}', space=vmem, size = 0x1000, scoped, tag = 'scratch operand']
  #allocation4 [shape = 'f32[8,8]{1,0:T(8,128)}', space=vmem, size = 0x1000, scoped, tag = 'scratch operand']
  %s0 = inlined_call_operand.vmem [shape: bf16[2,4,8,8], index: 0, kind: input, shape index: {}]
  %s1 = inlined_call_operand.vmem [shape: bf16[2,4,8,8], index: 1, kind: input, shape index: {}]
  %s2 = inlined_call_operand.vmem [shape: bf16[2,4,8,8], index: 2, kind: input, shape index: {}]
  %s3 = inlined_call_operand.vmem [shape: bf16[2,4,8,8], index: 3, kind: output, shape index: {}]
  %s4 = sld [smem:[#allocation0]]
  $region53: #{transformer_encoder.7} parent=0
    _
  %s6 = ssub.s32 1, %s4
  %s7 = scalar_select 0, %s6, %s4
  loop: start=0, step=1, limit=10
  $region2: #{transformer_encoder.7} parent=0 // loop_pre_header
    _
  $region3: #{transformer_encoder.7} parent=0 // loop_header
    %s9 = sphi 0, %s13
    %p10 = scmp.ge.s32.totalorder %s9, 10
    %s16 = sphi 0, %s42
    %s17 = sphi 0, %s38
    %s18 = sphi 0, %s34
    %s19 = sphi 0, %s30
    %s20 = sphi 0, %s16
    %s21 = sphi 0, %s17
    %s22 = sphi 0, %s18
    %s23 = sphi 0, %s19
    %s24 = sphi 0, %s20
    %s25 = sphi 0, %s21
    %s26 = sphi 0, %s22
    %s27 = sphi 0, %s23
    %s49 = sphi 0, %s51
    %s52 = sphi 0, %s49
    %s53 = sphi 0, %s52
    %s69 = sphi 0, %s53
    %s79 = sphi 0, %s81
    %s82 = sphi 0, %s79
    %s83 = sphi 0, %s82
    %s99 = sphi 0, %s83
    %s109 = sphi 0, %s111
    %s112 = sphi 0, %s109
    %s113 = sphi 0, %s112
    %s129 = sphi 0, %s113
    %s139 = sphi 0, %s141
    %s142 = sphi 0, %s139
    %s143 = sphi 0, %s142
    %s159 = sphi 0, %s143
  $region4: #{transformer_encoder.7} parent=0 // loop_header_branch
    %12 = sbr.rel (%p10) target = $region8
  $region5: #{transformer_encoder.7} parent=0 // loop_body
    %s14 = ssub.s32 %s9, 1
    %s15 = ssub.s32 %s9, 2
    %s28 = sadd.s32 1, %s19
    %p29 = scmp.ge.s32.totalorder %s28, 1
    %s30 = scalar_select %p29, 0, %s28
    %s31 = sadd.s32 1, %s18
    %s32 = scalar_select %p29, %s31, %s18
    %p33 = scmp.ge.s32.totalorder %s32, 1
    %s34 = scalar_select %p33, 0, %s32
    %s35 = sadd.s32 1, %s17
    %s36 = scalar_select %p33, %s35, %s17
    %p37 = scmp.ge.s32.totalorder %s36, 4
    %s38 = scalar_select %p37, 0, %s36
    %s39 = sadd.s32 1, %s16
    %s40 = scalar_select %p37, %s39, %s16
    %p41 = scmp.ge.s32.totalorder %s40, 2
    %s42 = scalar_select %p41, 0, %s40
    %s43 = ssub.s32 %s16, %s42
    %s44 = ssub.s32 %s17, %s38
    %s45 = sor.u32 %s43, %s44
    %s46 = ssub.s32 %s18, %s34
    %s47 = sor.u32 %s45, %s46
    %p48 = scmp.eq.s32.totalorder %s47, 0
    %s50 = sadd.s32 %s49, 1
    %s51 = scalar_select %p48, %s49, %s50
    %p54 = pneg %p48
    %p55 = scmp.eq.s32.totalorder %s9, 7
    %p56 = por %p54, %p55
    %p57 = scmp.ne.s32.totalorder %s49, %s52
    %p58 = scmp.eq.s32.totalorder %s9, 0
    %p59 = por %p57, %p58
    %p60 = scmp.ne.s32.totalorder %s49, %s52
    %p61 = scmp.eq.s32.totalorder %s14, 7
    %p62 = por %p60, %p61
    %p63 = scmp.ne.s32.totalorder %s52, %s53
    %p64 = scmp.eq.s32.totalorder %s14, 0
    %p65 = por %p63, %p64
    %p66 = scmp.ne.s32.totalorder %s52, %s53
    %p67 = scmp.eq.s32.totalorder %s15, 7
    %p68 = por %p66, %p67
    %p70 = scmp.ne.s32.totalorder %s53, %s69
    %p71 = scmp.eq.s32.totalorder %s15, 0
    %p72 = por %p70, %p71
    %s73 = ssub.s32 %s16, %s42
    %s74 = ssub.s32 %s17, %s38
    %s75 = sor.u32 %s73, %s74
    %s76 = ssub.s32 %s19, %s30
    %s77 = sor.u32 %s75, %s76
    %p78 = scmp.eq.s32.totalorder %s77, 0
    %s80 = sadd.s32 %s79, 1
    %s81 = scalar_select %p78, %s79, %s80
    %p84 = pneg %p78
    %p85 = scmp.eq.s32.totalorder %s9, 7
    %p86 = por %p84, %p85
    %p87 = scmp.ne.s32.totalorder %s79, %s82
    %p88 = scmp.eq.s32.totalorder %s9, 0
    %p89 = por %p87, %p88
    %p90 = scmp.ne.s32.totalorder %s79, %s82
    %p91 = scmp.eq.s32.totalorder %s14, 7
    %p92 = por %p90, %p91
    %p93 = scmp.ne.s32.totalorder %s82, %s83
    %p94 = scmp.eq.s32.totalorder %s14, 0
    %p95 = por %p93, %p94
    %p96 = scmp.ne.s32.totalorder %s82, %s83
    %p97 = scmp.eq.s32.totalorder %s15, 7
    %p98 = por %p96, %p97
    %p100 = scmp.ne.s32.totalorder %s83, %s99
    %p101 = scmp.eq.s32.totalorder %s15, 0
    %p102 = por %p100, %p101
    %s103 = ssub.s32 %s16, %s42
    %s104 = ssub.s32 %s17, %s38
    %s105 = sor.u32 %s103, %s104
    %s106 = ssub.s32 %s19, %s30
    %s107 = sor.u32 %s105, %s106
    %p108 = scmp.eq.s32.totalorder %s107, 0
    %s110 = sadd.s32 %s109, 1
    %s111 = scalar_select %p108, %s109, %s110
    %p114 = pneg %p108
    %p115 = scmp.eq.s32.totalorder %s9, 7
    %p116 = por %p114, %p115
    %p117 = scmp.ne.s32.totalorder %s109, %s112
    %p118 = scmp.eq.s32.totalorder %s9, 0
    %p119 = por %p117, %p118
    %p120 = scmp.ne.s32.totalorder %s109, %s112
    %p121 = scmp.eq.s32.totalorder %s14, 7
    %p122 = por %p120, %p121
    %p123 = scmp.ne.s32.totalorder %s112, %s113
    %p124 = scmp.eq.s32.totalorder %s14, 0
    %p125 = por %p123, %p124
    %p126 = scmp.ne.s32.totalorder %s112, %s113
    %p127 = scmp.eq.s32.totalorder %s15, 7
    %p128 = por %p126, %p127
    %p130 = scmp.ne.s32.totalorder %s113, %s129
    %p131 = scmp.eq.s32.totalorder %s15, 0
    %p132 = por %p130, %p131
    %s133 = ssub.s32 %s16, %s42
    %s134 = ssub.s32 %s17, %s38
    %s135 = sor.u32 %s133, %s134
    %s136 = ssub.s32 %s18, %s34
    %s137 = sor.u32 %s135, %s136
    %p138 = scmp.eq.s32.totalorder %s137, 0
    %s140 = sadd.s32 %s139, 1
    %s141 = scalar_select %p138, %s139, %s140
    %p144 = pneg %p138
    %p145 = scmp.eq.s32.totalorder %s9, 7
    %p146 = por %p144, %p145
    %p147 = scmp.ne.s32.totalorder %s139, %s142
    %p148 = scmp.eq.s32.totalorder %s9, 0
    %p149 = por %p147, %p148
    %p150 = scmp.ne.s32.totalorder %s139, %s142
    %p151 = scmp.eq.s32.totalorder %s14, 7
    %p152 = por %p150, %p151
    %p153 = scmp.ne.s32.totalorder %s142, %s143
    %p154 = scmp.eq.s32.totalorder %s14, 0
    %p155 = por %p153, %p154
    %p156 = scmp.ne.s32.totalorder %s142, %s143
    %p157 = scmp.eq.s32.totalorder %s15, 7
    %p158 = por %p156, %p157
    %p160 = scmp.ne.s32.totalorder %s143, %s159
    %p161 = scmp.eq.s32.totalorder %s15, 0
    %p162 = por %p160, %p161
    %p163 = scmp.le.s32.totalorder 1, %s9
    %p164 = scmp.lt.s32.totalorder %s9, 9
    %p165 = pnand %p163, %p164
    %p166 = pneg %p165
    // Predicated region
    $region9: #{transformer_encoder.7} parent=5 // pred_check
      _
    $region10: #{transformer_encoder.7} parent=5 // pred_check_branch
      %168 = sbr.rel (%p165) target = $region12
    $region11: #{transformer_encoder.7} parent=5 // pred_region
      %s169 = ssub.s32 %s9, 1
    $region12: #{transformer_encoder.7} parent=5 // pred_fallthru
      _
    %p170 = scmp.lt.s32.totalorder %s9, 8
    // Predicated region
    $region13: #{transformer_encoder.7} parent=5 // pred_check
      %p171 = pneg %p170
    $region14: #{transformer_encoder.7} parent=5 // pred_check_branch
      %173 = sbr.rel (%p171) target = $region16
    $region15: #{transformer_encoder.7} parent=5 // pred_region
      // Predicated region
      $region17: #{transformer_encoder.7} parent=15 // pred_check
        %p174 = pneg %p59
      $region18: #{transformer_encoder.7} parent=15 // pred_check_branch
        %176 = sbr.rel (%p174) target = $region20
      $region19: #{transformer_encoder.7} parent=15 // pred_region
        %p177 = scmp.lt.s32.totalorder %s16, 1
        %s178 = scalar_select %p177, %s16, 1
        %p179 = scmp.lt.s32.totalorder %s17, 3
        %s180 = scalar_select %p179, %s17, 3
        %p181 = scmp.lt.s32.totalorder %s18, 0
        %s182 = scalar_select %p181, %s18, 0
        %s183 = sadd.s32 %s182, %s180
        %s184 = smul.addr %s178, 4
        %s185 = sadd.s32 %s183, %s184
        %s186 = smul.addr %s185, 4
        %s187 = scalar_lea.vmem %s0, %s186
      $region20: #{transformer_encoder.7} parent=15 // pred_fallthru
        _
      // Predicated region
      $region21: #{transformer_encoder.7} parent=15 // pred_check
        %p188 = pneg %p89
      $region22: #{transformer_encoder.7} parent=15 // pred_check_branch
        %190 = sbr.rel (%p188) target = $region24
      $region23: #{transformer_encoder.7} parent=15 // pred_region
        %p191 = scmp.lt.s32.totalorder %s16, 1
        %s192 = scalar_select %p191, %s16, 1
        %p193 = scmp.lt.s32.totalorder %s17, 3
        %s194 = scalar_select %p193, %s17, 3
        %p195 = scmp.lt.s32.totalorder %s19, 0
        %s196 = scalar_select %p195, %s19, 0
        %s197 = sadd.s32 %s196, %s194
        %s198 = smul.addr %s192, 4
        %s199 = sadd.s32 %s197, %s198
        %s200 = smul.addr %s199, 4
        %s201 = scalar_lea.vmem %s1, %s200
      $region24: #{transformer_encoder.7} parent=15 // pred_fallthru
        _
      // Predicated region
      $region25: #{transformer_encoder.7} parent=15 // pred_check
        %p202 = pneg %p119
      $region26: #{transformer_encoder.7} parent=15 // pred_check_branch
        %204 = sbr.rel (%p202) target = $region28
      $region27: #{transformer_encoder.7} parent=15 // pred_region
        %p205 = scmp.lt.s32.totalorder %s16, 1
        %s206 = scalar_select %p205, %s16, 1
        %p207 = scmp.lt.s32.totalorder %s17, 3
        %s208 = scalar_select %p207, %s17, 3
        %p209 = scmp.lt.s32.totalorder %s19, 0
        %s210 = scalar_select %p209, %s19, 0
        %s211 = sadd.s32 %s210, %s208
        %s212 = smul.addr %s206, 4
        %s213 = sadd.s32 %s211, %s212
        %s214 = smul.addr %s213, 4
        %s215 = scalar_lea.vmem %s2, %s214
      $region28: #{transformer_encoder.7} parent=15 // pred_fallthru
        _
    $region16: #{transformer_encoder.7} parent=5 // pred_fallthru
      _
    %p216 = scmp.le.s32.totalorder 1, %s9
    %p217 = scmp.lt.s32.totalorder %s9, 9
    %p218 = pnand %p216, %p217
    %p219 = pneg %p218
    // Predicated region
    $region29: #{transformer_encoder.7} parent=5 // pred_check
      _
    $region30: #{transformer_encoder.7} parent=5 // pred_check_branch
      %221 = sbr.rel (%p218) target = $region32
    $region31: #{transformer_encoder.7} parent=5 // pred_region
      %s222 = ssub.s32 %s9, 1
      %p223 = scmp.lt.s32.totalorder %s20, 1
      %s224 = scalar_select %p223, %s20, 1
      %p225 = scmp.lt.s32.totalorder %s21, 3
      %s226 = scalar_select %p225, %s21, 3
      %p227 = scmp.lt.s32.totalorder %s22, 0
      %s228 = scalar_select %p227, %s22, 0
      %s229 = sadd.s32 %s228, %s226
      %s230 = smul.addr %s224, 4
      %s231 = sadd.s32 %s229, %s230
      %s232 = smul.addr %s231, 4
      %s233 = scalar_lea.vmem %s0, %s232
      %p234 = pneg %p65
      %p235 = pneg %p62
      %p236 = scmp.lt.s32.totalorder %s20, 1
      %s237 = scalar_select %p236, %s20, 1
      %p238 = scmp.lt.s32.totalorder %s21, 3
      %s239 = scalar_select %p238, %s21, 3
      %p240 = scmp.lt.s32.totalorder %s23, 0
      %s241 = scalar_select %p240, %s23, 0
      %s242 = sadd.s32 %s241, %s239
      %s243 = smul.addr %s237, 4
      %s244 = sadd.s32 %s242, %s243
      %s245 = smul.addr %s244, 4
      %s246 = scalar_lea.vmem %s1, %s245
      %p247 = pneg %p95
      %p248 = pneg %p92
      %p249 = scmp.lt.s32.totalorder %s20, 1
      %s250 = scalar_select %p249, %s20, 1
      %p251 = scmp.lt.s32.totalorder %s21, 3
      %s252 = scalar_select %p251, %s21, 3
      %p253 = scmp.lt.s32.totalorder %s23, 0
      %s254 = scalar_select %p253, %s23, 0
      %s255 = sadd.s32 %s254, %s252
      %s256 = smul.addr %s250, 4
      %s257 = sadd.s32 %s255, %s256
      %s258 = smul.addr %s257, 4
      %s259 = scalar_lea.vmem %s2, %s258
      %p260 = pneg %p125
      %p261 = pneg %p122
      %p262 = pneg %p155
      %p263 = pneg %p152
      %p264 = scmp.lt.s32.totalorder %s20, 1
      %s265 = scalar_select %p264, %s20, 1
      %p266 = scmp.lt.s32.totalorder %s21, 3
      %s267 = scalar_select %p266, %s21, 3
      %p268 = scmp.lt.s32.totalorder %s22, 0
      %s269 = scalar_select %p268, %s22, 0
      %s270 = sadd.s32 %s269, %s267
      %s271 = smul.addr %s265, 4
      %s272 = sadd.s32 %s270, %s271
      %s273 = smul.addr %s272, 4
      %s274 = scalar_lea.vmem %s3, %s273
      %p275 = scmp.lt.s32.totalorder %s20, 1
      %s276 = scalar_select %p275, %s20, 1
      %p277 = scmp.lt.s32.totalorder %s21, 3
      %s278 = scalar_select %p277, %s21, 3
      %p279 = scmp.lt.s32.totalorder %s22, 0
      %s280 = scalar_select %p279, %s22, 0
      %s281 = sadd.s32 %s280, %s278
      %s282 = smul.addr %s276, 4
      %s283 = sadd.s32 %s281, %s282
      %s284 = smul.addr %s283, 4
      %s285 = scalar_lea.vmem %s0, %s284
      %p286 = scmp.lt.s32.totalorder %s20, 1
      %s287 = scalar_select %p286, %s20, 1
      %p288 = scmp.lt.s32.totalorder %s21, 3
      %s289 = scalar_select %p288, %s21, 3
      %p290 = scmp.lt.s32.totalorder %s23, 0
      %s291 = scalar_select %p290, %s23, 0
      %s292 = sadd.s32 %s291, %s289
      %s293 = smul.addr %s287, 4
      %s294 = sadd.s32 %s292, %s293
      %s295 = smul.addr %s294, 4
      %s296 = scalar_lea.vmem %s1, %s295
      %p297 = scmp.lt.s32.totalorder %s20, 1
      %s298 = scalar_select %p297, %s20, 1
      %p299 = scmp.lt.s32.totalorder %s21, 3
      %s300 = scalar_select %p299, %s21, 3
      %p301 = scmp.lt.s32.totalorder %s23, 0
      %s302 = scalar_select %p301, %s23, 0
      %s303 = sadd.s32 %s302, %s300
      %s304 = smul.addr %s298, 4
      %s305 = sadd.s32 %s303, %s304
      %s306 = smul.addr %s305, 4
      %s307 = scalar_lea.vmem %s2, %s306
      %p308 = scmp.lt.s32.totalorder %s20, 1
      %s309 = scalar_select %p308, %s20, 1
      %p310 = scmp.lt.s32.totalorder %s21, 3
      %s311 = scalar_select %p310, %s21, 3
      %p312 = scmp.lt.s32.totalorder %s22, 0
      %s313 = scalar_select %p312, %s22, 0
      %s314 = sadd.s32 %s313, %s311
      %s315 = smul.addr %s309, 4
      %s316 = sadd.s32 %s314, %s315
      %s317 = smul.addr %s316, 4
      %s318 = scalar_lea.vmem %s3, %s317
      %p320 = scmp.eq.s32.totalorder %s23, 0
      // Predicated region
      $region33: #{transformer_encoder.7} parent=31 // pred_check
        %p321 = pneg %p320
      $region34: #{transformer_encoder.7} parent=31 // pred_check_branch
        %323 = sbr.rel (%p321) target = $region36
      $region35: #{transformer_encoder.7} parent=31 // pred_region
        %vm324 = vcmask 7168
        %325 = vst.msk [vmem:[#allocation2] sm:$0xff] %vm324, -inf
        %326 = vst.msk [vmem:[#allocation3] sm:$0xff] %vm324, 0.0
        %vm327 = vcmask 64512
        %328 = vst.msk [vmem:[#allocation4] sm:$0xff] %vm327, 0.0
      $region36: #{transformer_encoder.7} parent=31 // pred_fallthru
        _
      %v329 = vld [vmem:[%s285] sm:$0xf]
      %v330 = vld [vmem:[%s296] sm:$0xf]
      %vm331 = vcmask 64512
      %v333 = vsel %vm331, %v329, 0
      %v336 = vsel %vm331, %v330, 0
      %338 = vmatprep.subr.bf16.mxu0 0
      %339 = vmatpush1.bf16.xpose.msra.mxu0 0
      %340 = vmatprep.subr.bf16.mxu0 0
      %341 = vmatpush1.bf16.xpose.msra.mxu0 0
      %342 = vmatprep.subr.bf16.mxu0 0
      %343 = vmatpush1.bf16.xpose.msra.mxu0 0
      %344 = vmatprep.subr.bf16.mxu0 0
      %345 = vmatpush1.bf16.xpose.msra.mxu0 0
      %346 = vmatprep.subr.bf16.mxu0 0
      %347 = vmatpush1.bf16.xpose.msra.mxu0 0
      %348 = vmatprep.subr.bf16.mxu0 0
      %349 = vmatpush1.bf16.xpose.msra.mxu0 0
      %350 = vmatprep.subr.bf16.mxu0 0
      %351 = vmatpush1.bf16.xpose.msra.mxu0 0
      %352 = vmatprep.subr.bf16.mxu0 0
      %353 = vmatpush1.bf16.xpose.msra.mxu0 %v336
      %354 = vmatprep.subr.bf16.mxu0 0
      %355 = vmatpush2.bf16.xpose.msra.mxu0 0
      %356 = vmatprep.subr.bf16.mxu0 0
      %357 = vmatpush2.bf16.xpose.msra.mxu0 0
      %358 = vmatprep.subr.bf16.mxu0 0
      %359 = vmatpush2.bf16.xpose.msra.mxu0 0
      %360 = vmatprep.subr.bf16.mxu0 0
      %361 = vmatpush2.bf16.xpose.msra.mxu0 0
      %362 = vmatprep.subr.bf16.mxu0 0
      %363 = vmatpush2.bf16.xpose.msra.mxu0 0
      %364 = vmatprep.subr.bf16.mxu0 0
      %365 = vmatpush2.bf16.xpose.msra.mxu0 0
      %366 = vmatprep.subr.bf16.mxu0 0
      %367 = vmatpush2.bf16.xpose.msra.mxu0 0
      %368 = vmatprep.subr.bf16.mxu0 0
      %369 = vmatpush2.bf16.xpose.msra.mxu0 0
      %370 = vmatprep.mubr.bf16.mxu0 0
      %371 = vmatmul.mubr.bf16.gmra.mxu0 %v333
      %v372 = vpop.f32.mrf.mxu0
      %v373 = vadd.f32 0.0, %v372
      %v374 = vpop.f32.mrf.mxu0
      %v375 = vpop.f32.mrf.mxu0
      %v376 = vpop.f32.mrf.mxu0
      %377 = vdwg.mxu0
      %v378 = vld [vmem:[#allocation2] sm:$0xff]
      %v379 = vsel %vm331, %v373, -inf
      %380 = vmax.xlane.f32.xlu0 %v379
      %v381 = vpop.xlane.xlu0 %380
      %v382 = vmax.f32 %v378, %v381
      %v383 = vsub.f32 %v378, %v382
      %v384 = vmul.f32 %v383, 1.442695
      %v385 = vpow.pop %v384
      %387 = vset.pattern.permute.xlu0 0
      %388 = vperm.xlu0 %387, %v382
      %v389 = vpop.permute.xlu0 %388
      %v391 = vsub.f32 %v373, %v389
      %v392 = vmul.f32 %v391, 1.442695
      %v393 = vpow.pop %v392
      %v394 = vld [vmem:[#allocation3] sm:$0xff]
      %v395 = vmul.f32 %v385, %v394
      %v396 = vsel %vm331, %v393, 0.0
      %397 = vadd.xlane.f32.xlu0 %v396
      %v398 = vpop.xlane.xlu0 %397
      %v399 = vadd.f32 %v395, %v398
      %vm400 = vcmask 7168
      %401 = vst.msk [vmem:[#allocation3] sm:$0xff] %vm400, %v399
      %v402 = vld [vmem:[#allocation4] sm:$0xff]
      %404 = vset.pattern.permute.xlu0 0
      %405 = vperm.xlu0 %404, %v385
      %v406 = vpop.permute.xlu0 %405
      %v408 = vmul.f32 %v406, %v402
      %v409 = vpack.c.bf16 %v393, %v393
      %v410 = vld [vmem:[%s307] sm:$0xf]
      %v412 = vsel %vm331, %v409, 0
      %vm414 = vcmask 1043456
      %v416 = vsel %vm414, %v410, 0
      %418 = vmatprep.subr.bf16.mxu0 0
      %419 = vmatpush1.bf16.msra.mxu0 0
      %420 = vmatprep.subr.bf16.mxu0 0
      %421 = vmatpush1.bf16.msra.mxu0 0
      %422 = vmatprep.subr.bf16.mxu0 0
      %423 = vmatpush1.bf16.msra.mxu0 0
      %424 = vmatprep.subr.bf16.mxu0 0
      %425 = vmatpush1.bf16.msra.mxu0 0
      %426 = vmatprep.subr.bf16.mxu0 0
      %427 = vmatpush1.bf16.msra.mxu0 0
      %428 = vmatprep.subr.bf16.mxu0 0
      %429 = vmatpush1.bf16.msra.mxu0 0
      %430 = vmatprep.subr.bf16.mxu0 0
      %431 = vmatpush1.bf16.msra.mxu0 0
      %432 = vmatprep.subr.bf16.mxu0 0
      %433 = vmatpush1.bf16.msra.mxu0 %v416
      %434 = vmatprep.subr.bf16.mxu0 0
      %435 = vmatpush2.bf16.msra.mxu0 0
      %436 = vmatprep.subr.bf16.mxu0 0
      %437 = vmatpush2.bf16.msra.mxu0 0
      %438 = vmatprep.subr.bf16.mxu0 0
      %439 = vmatpush2.bf16.msra.mxu0 0
      %440 = vmatprep.subr.bf16.mxu0 0
      %441 = vmatpush2.bf16.msra.mxu0 0
      %442 = vmatprep.subr.bf16.mxu0 0
      %443 = vmatpush2.bf16.msra.mxu0 0
      %444 = vmatprep.subr.bf16.mxu0 0
      %445 = vmatpush2.bf16.msra.mxu0 0
      %446 = vmatprep.subr.bf16.mxu0 0
      %447 = vmatpush2.bf16.msra.mxu0 0
      %448 = vmatprep.subr.bf16.mxu0 0
      %449 = vmatpush2.bf16.msra.mxu0 0
      %450 = vmatprep.mubr.bf16.mxu0 0
      %451 = vmatmul.mubr.bf16.gmra.mxu0 %v412
      %v452 = vpop.f32.mrf.mxu0
      %v453 = vadd.f32 0.0, %v452
      %v454 = vpop.f32.mrf.mxu0
      %v455 = vpop.f32.mrf.mxu0
      %v456 = vpop.f32.mrf.mxu0
      %457 = vdwg.mxu0
      %v458 = vadd.f32 %v408, %v453
      %459 = vst.msk [vmem:[#allocation4] sm:$0xff] %vm331, %v458
      %460 = vst.msk [vmem:[#allocation2] sm:$0xff] %vm400, %v382
      // Predicated region
      $region37: #{transformer_encoder.7} parent=31 // pred_check
        %p461 = pneg %p320
      $region38: #{transformer_encoder.7} parent=31 // pred_check_branch
        %463 = sbr.rel (%p461) target = $region40
      $region39: #{transformer_encoder.7} parent=31 // pred_region
        %v464 = vld [vmem:[#allocation4] sm:$0xff]
        %v465 = vld [vmem:[#allocation3] sm:$0xff]
        %467 = vset.pattern.permute.xlu0 0
        %468 = vperm.xlu0 %467, %v465
        %v469 = vpop.permute.xlu0 %468
        %v471 = vrcp.pop %v469
        %v472 = vmul.f32 %v464, %v471
        %v473 = vpack.c.bf16 %v472, %v472
        %vm474 = vcmask 60416
        %475 = vst.msk [vmem:[%s318] sm:$0xf] %vm474, %v473
      $region40: #{transformer_encoder.7} parent=31 // pred_fallthru
        _
      %p476 = scmp.lt.s32.totalorder %s20, 1
      %s477 = scalar_select %p476, %s20, 1
      %p478 = scmp.lt.s32.totalorder %s21, 3
      %s479 = scalar_select %p478, %s21, 3
      %p480 = scmp.lt.s32.totalorder %s22, 0
      %s481 = scalar_select %p480, %s22, 0
      %s482 = sadd.s32 %s481, %s479
      %s483 = smul.addr %s477, 4
      %s484 = sadd.s32 %s482, %s483
      %s485 = smul.addr %s484, 4
      %s486 = scalar_lea.vmem %s3, %s485
      // Predicated region
      $region41: #{transformer_encoder.7} parent=31 // pred_check
        %p487 = pneg %p152
      $region42: #{transformer_encoder.7} parent=31 // pred_check_branch
        %489 = sbr.rel (%p487) target = $region44
      $region43: #{transformer_encoder.7} parent=31 // pred_region
        _
      $region44: #{transformer_encoder.7} parent=31 // pred_fallthru
        _
    $region32: #{transformer_encoder.7} parent=5 // pred_fallthru
      _
    %p490 = scmp.le.s32.totalorder 2, %s9
    // Predicated region
    $region45: #{transformer_encoder.7} parent=5 // pred_check
      %p491 = pneg %p490
    $region46: #{transformer_encoder.7} parent=5 // pred_check_branch
      %493 = sbr.rel (%p491) target = $region48
    $region47: #{transformer_encoder.7} parent=5 // pred_region
      %s494 = ssub.s32 %s9, 2
      // Predicated region
      $region49: #{transformer_encoder.7} parent=47 // pred_check
        %p495 = pneg %p158
      $region50: #{transformer_encoder.7} parent=47 // pred_check_branch
        %497 = sbr.rel (%p495) target = $region52
      $region51: #{transformer_encoder.7} parent=47 // pred_region
        %p498 = scmp.lt.s32.totalorder %s24, 1
        %s499 = scalar_select %p498, %s24, 1
        %p500 = scmp.lt.s32.totalorder %s25, 3
        %s501 = scalar_select %p500, %s25, 3
        %p502 = scmp.lt.s32.totalorder %s26, 0
        %s503 = scalar_select %p502, %s26, 0
        %s504 = sadd.s32 %s503, %s501
        %s505 = smul.addr %s499, 4
        %s506 = sadd.s32 %s504, %s505
        %s507 = smul.addr %s506, 4
        %s508 = scalar_lea.vmem %s3, %s507
      $region52: #{transformer_encoder.7} parent=47 // pred_fallthru
        _
    $region48: #{transformer_encoder.7} parent=5 // pred_fallthru
      _
  $region6: #{transformer_encoder.7} parent=0 // loop_footer
    %s13 = sadd.s32 1, %s9
  $region7: #{transformer_encoder.7} parent=0 // loop_footer_branch
    %8 = sbr.rel target = $region3
  $region8: #{transformer_encoder.7} parent=0 // loop_exit
    _

// kernel: transformer_encoder.8
$region0: #{transformer_encoder.8}
  #allocation0 [shape = 'u32[]', space=smem, size = 0x4, offset = 0x4, fixed_abs, tag = 'smem constant byte address 0x4 - core index']
  #allocation1 [shape = 'u32[144,128]{1,0:T(1,128)}', space=vmem, size = 0x12000, scoped, tag = 'internal scratch']
  #allocation2 [shape = 'f32[8,32]{1,0:T(8,128)}', space=vmem, size = 0x1000, scoped, tag = 'scratch operand']
  #allocation3 [shape = 'f32[8,32]{1,0:T(8,128)}', space=vmem, size = 0x1000, scoped, tag = 'scratch operand']
  %s0 = inlined_call_operand.vmem [shape: f32[2,8,32], index: 0, kind: input, shape index: {}]
  %s1 = inlined_call_operand.vmem [shape: bf16[2,4,8,8], index: 1, kind: input, shape index: {}]
  %s2 = inlined_call_operand.vmem [shape: bf16[4,8,32], index: 2, kind: input, shape index: {}]
  %s3 = inlined_call_operand.vmem [shape: f32[1,32], index: 3, kind: input, shape index: {}]
  %s4 = inlined_call_operand.vmem [shape: bf16[32,64], index: 4, kind: input, shape index: {}]
  %s5 = inlined_call_operand.vmem [shape: f32[1,64], index: 5, kind: input, shape index: {}]
  %s6 = inlined_call_operand.vmem [shape: bf16[64,32], index: 6, kind: input, shape index: {}]
  %s7 = inlined_call_operand.vmem [shape: f32[1,32], index: 7, kind: input, shape index: {}]
  %s8 = inlined_call_operand.vmem [shape: f32[1,32], index: 8, kind: input, shape index: {}]
  %s9 = inlined_call_operand.vmem [shape: f32[1,32], index: 9, kind: input, shape index: {}]
  %s10 = inlined_call_operand.vmem [shape: f32[1,32], index: 10, kind: input, shape index: {}]
  %s11 = inlined_call_operand.vmem [shape: f32[1,32], index: 11, kind: input, shape index: {}]
  %s12 = inlined_call_operand.vmem [shape: f32[2,8,32], index: 12, kind: output, shape index: {}]
  %s13 = sld [smem:[#allocation0]]
  $region89: #{transformer_encoder.8} parent=0
    _
  %s15 = ssub.s32 1, %s13
  %s16 = scalar_select 0, %s15, %s13
  loop: start=0, step=1, limit=4
  $region2: #{transformer_encoder.8} parent=0 // loop_pre_header
    _
  $region3: #{transformer_encoder.8} parent=0 // loop_header
    %s18 = sphi 0, %s22
    %p19 = scmp.ge.s32.totalorder %s18, 4
    %s25 = sphi 0, %s44
    %s26 = sphi 0, %s40
    %s27 = sphi 0, %s36
    %s28 = sphi 0, %s25
    %s29 = sphi 0, %s26
    %s30 = sphi 0, %s27
    %s31 = sphi 0, %s28
    %s32 = sphi 0, %s29
    %s33 = sphi 0, %s30
    %s49 = sphi 0, %s51
    %s52 = sphi 0, %s49
    %s53 = sphi 0, %s52
    %s69 = sphi 0, %s53
    %s77 = sphi 0, %s79
    %s80 = sphi 0, %s77
    %s81 = sphi 0, %s80
    %s97 = sphi 0, %s81
    %s101 = sphi 0, %s101
    %s103 = sphi 0, %s101
    %s104 = sphi 0, %s103
    %s118 = sphi 0, %s104
    %s122 = sphi 0, %s122
    %s124 = sphi 0, %s122
    %s125 = sphi 0, %s124
    %s139 = sphi 0, %s125
    %s145 = sphi 0, %s147
    %s148 = sphi 0, %s145
    %s149 = sphi 0, %s148
    %s165 = sphi 0, %s149
    %s171 = sphi 0, %s173
    %s174 = sphi 0, %s171
    %s175 = sphi 0, %s174
    %s191 = sphi 0, %s175
    %s197 = sphi 0, %s199
    %s200 = sphi 0, %s197
    %s201 = sphi 0, %s200
    %s217 = sphi 0, %s201
    %s221 = sphi 0, %s221
    %s223 = sphi 0, %s221
    %s224 = sphi 0, %s223
    %s238 = sphi 0, %s224
    %s242 = sphi 0, %s242
    %s244 = sphi 0, %s242
    %s245 = sphi 0, %s244
    %s259 = sphi 0, %s245
    %s263 = sphi 0, %s263
    %s265 = sphi 0, %s263
    %s266 = sphi 0, %s265
    %s280 = sphi 0, %s266
    %s284 = sphi 0, %s284
    %s286 = sphi 0, %s284
    %s287 = sphi 0, %s286
    %s301 = sphi 0, %s287
    %s305 = sphi 0, %s305
    %s307 = sphi 0, %s305
    %s308 = sphi 0, %s307
    %s322 = sphi 0, %s308
    %s330 = sphi 0, %s332
    %s333 = sphi 0, %s330
    %s334 = sphi 0, %s333
    %s350 = sphi 0, %s334
  $region4: #{transformer_encoder.8} parent=0 // loop_header_branch
    %21 = sbr.rel (%p19) target = $region8
  $region5: #{transformer_encoder.8} parent=0 // loop_body
    %s23 = ssub.s32 %s18, 1
    %s24 = ssub.s32 %s18, 2
    %s34 = sadd.s32 1, %s27
    %p35 = scmp.ge.s32.totalorder %s34, 1
    %s36 = scalar_select %p35, 0, %s34
    %s37 = sadd.s32 1, %s26
    %s38 = scalar_select %p35, %s37, %s26
    %p39 = scmp.ge.s32.totalorder %s38, 1
    %s40 = scalar_select %p39, 0, %s38
    %s41 = sadd.s32 1, %s25
    %s42 = scalar_select %p39, %s41, %s25
    %p43 = scmp.ge.s32.totalorder %s42, 2
    %s44 = scalar_select %p43, 0, %s42
    %s45 = ssub.s32 %s25, %s44
    %s46 = ssub.s32 %s26, %s40
    %s47 = sor.u32 %s45, %s46
    %p48 = scmp.eq.s32.totalorder %s47, 0
    %s50 = sadd.s32 %s49, 1
    %s51 = scalar_select %p48, %s49, %s50
    %p54 = pneg %p48
    %p55 = scmp.eq.s32.totalorder %s18, 1
    %p56 = por %p54, %p55
    %p57 = scmp.ne.s32.totalorder %s49, %s52
    %p58 = scmp.eq.s32.totalorder %s18, 0
    %p59 = por %p57, %p58
    %p60 = scmp.ne.s32.totalorder %s49, %s52
    %p61 = scmp.eq.s32.totalorder %s23, 1
    %p62 = por %p60, %p61
    %p63 = scmp.ne.s32.totalorder %s52, %s53
    %p64 = scmp.eq.s32.totalorder %s23, 0
    %p65 = por %p63, %p64
    %p66 = scmp.ne.s32.totalorder %s52, %s53
    %p67 = scmp.eq.s32.totalorder %s24, 1
    %p68 = por %p66, %p67
    %p70 = scmp.ne.s32.totalorder %s53, %s69
    %p71 = scmp.eq.s32.totalorder %s24, 0
    %p72 = por %p70, %p71
    %s73 = ssub.s32 %s25, %s44
    %s74 = ssub.s32 %s26, %s40
    %s75 = sor.u32 %s73, %s74
    %p76 = scmp.eq.s32.totalorder %s75, 0
    %s78 = sadd.s32 %s77, 1
    %s79 = scalar_select %p76, %s77, %s78
    %p82 = pneg %p76
    %p83 = scmp.eq.s32.totalorder %s18, 1
    %p84 = por %p82, %p83
    %p85 = scmp.ne.s32.totalorder %s77, %s80
    %p86 = scmp.eq.s32.totalorder %s18, 0
    %p87 = por %p85, %p86
    %p88 = scmp.ne.s32.totalorder %s77, %s80
    %p89 = scmp.eq.s32.totalorder %s23, 1
    %p90 = por %p88, %p89
    %p91 = scmp.ne.s32.totalorder %s80, %s81
    %p92 = scmp.eq.s32.totalorder %s23, 0
    %p93 = por %p91, %p92
    %p94 = scmp.ne.s32.totalorder %s80, %s81
    %p95 = scmp.eq.s32.totalorder %s24, 1
    %p96 = por %p94, %p95
    %p98 = scmp.ne.s32.totalorder %s81, %s97
    %p99 = scmp.eq.s32.totalorder %s24, 0
    %p100 = por %p98, %p99
    %s102 = sadd.s32 %s101, 1
    %p105 = scmp.eq.s32.totalorder %s18, 1
    %p106 = scmp.ne.s32.totalorder %s101, %s103
    %p107 = scmp.eq.s32.totalorder %s18, 0
    %p108 = por %p106, %p107
    %p109 = scmp.ne.s32.totalorder %s101, %s103
    %p110 = scmp.eq.s32.totalorder %s23, 1
    %p111 = por %p109, %p110
    %p112 = scmp.ne.s32.totalorder %s103, %s104
    %p113 = scmp.eq.s32.totalorder %s23, 0
    %p114 = por %p112, %p113
    %p115 = scmp.ne.s32.totalorder %s103, %s104
    %p116 = scmp.eq.s32.totalorder %s24, 1
    %p117 = por %p115, %p116
    %p119 = scmp.ne.s32.totalorder %s104, %s118
    %p120 = scmp.eq.s32.totalorder %s24, 0
    %p121 = por %p119, %p120
    %s123 = sadd.s32 %s122, 1
    %p126 = scmp.eq.s32.totalorder %s18, 1
    %p127 = scmp.ne.s32.totalorder %s122, %s124
    %p128 = scmp.eq.s32.totalorder %s18, 0
    %p129 = por %p127, %p128
    %p130 = scmp.ne.s32.totalorder %s122, %s124
    %p131 = scmp.eq.s32.totalorder %s23, 1
    %p132 = por %p130, %p131
    %p133 = scmp.ne.s32.totalorder %s124, %s125
    %p134 = scmp.eq.s32.totalorder %s23, 0
    %p135 = por %p133, %p134
    %p136 = scmp.ne.s32.totalorder %s124, %s125
    %p137 = scmp.eq.s32.totalorder %s24, 1
    %p138 = por %p136, %p137
    %p140 = scmp.ne.s32.totalorder %s125, %s139
    %p141 = scmp.eq.s32.totalorder %s24, 0
    %p142 = por %p140, %p141
    %s143 = ssub.s32 %s27, %s36
    %p144 = scmp.eq.s32.totalorder %s143, 0
    %s146 = sadd.s32 %s145, 1
    %s147 = scalar_select %p144, %s145, %s146
    %p150 = pneg %p144
    %p151 = scmp.eq.s32.totalorder %s18, 1
    %p152 = por %p150, %p151
    %p153 = scmp.ne.s32.totalorder %s145, %s148
    %p154 = scmp.eq.s32.totalorder %s18, 0
    %p155 = por %p153, %p154
    %p156 = scmp.ne.s32.totalorder %s145, %s148
    %p157 = scmp.eq.s32.totalorder %s23, 1
    %p158 = por %p156, %p157
    %p159 = scmp.ne.s32.totalorder %s148, %s149
    %p160 = scmp.eq.s32.totalorder %s23, 0
    %p161 = por %p159, %p160
    %p162 = scmp.ne.s32.totalorder %s148, %s149
    %p163 = scmp.eq.s32.totalorder %s24, 1
    %p164 = por %p162, %p163
    %p166 = scmp.ne.s32.totalorder %s149, %s165
    %p167 = scmp.eq.s32.totalorder %s24, 0
    %p168 = por %p166, %p167
    %s169 = ssub.s32 %s27, %s36
    %p170 = scmp.eq.s32.totalorder %s169, 0
    %s172 = sadd.s32 %s171, 1
    %s173 = scalar_select %p170, %s171, %s172
    %p176 = pneg %p170
    %p177 = scmp.eq.s32.totalorder %s18, 1
    %p178 = por %p176, %p177
    %p179 = scmp.ne.s32.totalorder %s171, %s174
    %p180 = scmp.eq.s32.totalorder %s18, 0
    %p181 = por %p179, %p180
    %p182 = scmp.ne.s32.totalorder %s171, %s174
    %p183 = scmp.eq.s32.totalorder %s23, 1
    %p184 = por %p182, %p183
    %p185 = scmp.ne.s32.totalorder %s174, %s175
    %p186 = scmp.eq.s32.totalorder %s23, 0
    %p187 = por %p185, %p186
    %p188 = scmp.ne.s32.totalorder %s174, %s175
    %p189 = scmp.eq.s32.totalorder %s24, 1
    %p190 = por %p188, %p189
    %p192 = scmp.ne.s32.totalorder %s175, %s191
    %p193 = scmp.eq.s32.totalorder %s24, 0
    %p194 = por %p192, %p193
    %s195 = ssub.s32 %s27, %s36
    %p196 = scmp.eq.s32.totalorder %s195, 0
    %s198 = sadd.s32 %s197, 1
    %s199 = scalar_select %p196, %s197, %s198
    %p202 = pneg %p196
    %p203 = scmp.eq.s32.totalorder %s18, 1
    %p204 = por %p202, %p203
    %p205 = scmp.ne.s32.totalorder %s197, %s200
    %p206 = scmp.eq.s32.totalorder %s18, 0
    %p207 = por %p205, %p206
    %p208 = scmp.ne.s32.totalorder %s197, %s200
    %p209 = scmp.eq.s32.totalorder %s23, 1
    %p210 = por %p208, %p209
    %p211 = scmp.ne.s32.totalorder %s200, %s201
    %p212 = scmp.eq.s32.totalorder %s23, 0
    %p213 = por %p211, %p212
    %p214 = scmp.ne.s32.totalorder %s200, %s201
    %p215 = scmp.eq.s32.totalorder %s24, 1
    %p216 = por %p214, %p215
    %p218 = scmp.ne.s32.totalorder %s201, %s217
    %p219 = scmp.eq.s32.totalorder %s24, 0
    %p220 = por %p218, %p219
    %s222 = sadd.s32 %s221, 1
    %p225 = scmp.eq.s32.totalorder %s18, 1
    %p226 = scmp.ne.s32.totalorder %s221, %s223
    %p227 = scmp.eq.s32.totalorder %s18, 0
    %p228 = por %p226, %p227
    %p229 = scmp.ne.s32.totalorder %s221, %s223
    %p230 = scmp.eq.s32.totalorder %s23, 1
    %p231 = por %p229, %p230
    %p232 = scmp.ne.s32.totalorder %s223, %s224
    %p233 = scmp.eq.s32.totalorder %s23, 0
    %p234 = por %p232, %p233
    %p235 = scmp.ne.s32.totalorder %s223, %s224
    %p236 = scmp.eq.s32.totalorder %s24, 1
    %p237 = por %p235, %p236
    %p239 = scmp.ne.s32.totalorder %s224, %s238
    %p240 = scmp.eq.s32.totalorder %s24, 0
    %p241 = por %p239, %p240
    %s243 = sadd.s32 %s242, 1
    %p246 = scmp.eq.s32.totalorder %s18, 1
    %p247 = scmp.ne.s32.totalorder %s242, %s244
    %p248 = scmp.eq.s32.totalorder %s18, 0
    %p249 = por %p247, %p248
    %p250 = scmp.ne.s32.totalorder %s242, %s244
    %p251 = scmp.eq.s32.totalorder %s23, 1
    %p252 = por %p250, %p251
    %p253 = scmp.ne.s32.totalorder %s244, %s245
    %p254 = scmp.eq.s32.totalorder %s23, 0
    %p255 = por %p253, %p254
    %p256 = scmp.ne.s32.totalorder %s244, %s245
    %p257 = scmp.eq.s32.totalorder %s24, 1
    %p258 = por %p256, %p257
    %p260 = scmp.ne.s32.totalorder %s245, %s259
    %p261 = scmp.eq.s32.totalorder %s24, 0
    %p262 = por %p260, %p261
    %s264 = sadd.s32 %s263, 1
    %p267 = scmp.eq.s32.totalorder %s18, 1
    %p268 = scmp.ne.s32.totalorder %s263, %s265
    %p269 = scmp.eq.s32.totalorder %s18, 0
    %p270 = por %p268, %p269
    %p271 = scmp.ne.s32.totalorder %s263, %s265
    %p272 = scmp.eq.s32.totalorder %s23, 1
    %p273 = por %p271, %p272
    %p274 = scmp.ne.s32.totalorder %s265, %s266
    %p275 = scmp.eq.s32.totalorder %s23, 0
    %p276 = por %p274, %p275
    %p277 = scmp.ne.s32.totalorder %s265, %s266
    %p278 = scmp.eq.s32.totalorder %s24, 1
    %p279 = por %p277, %p278
    %p281 = scmp.ne.s32.totalorder %s266, %s280
    %p282 = scmp.eq.s32.totalorder %s24, 0
    %p283 = por %p281, %p282
    %s285 = sadd.s32 %s284, 1
    %p288 = scmp.eq.s32.totalorder %s18, 1
    %p289 = scmp.ne.s32.totalorder %s284, %s286
    %p290 = scmp.eq.s32.totalorder %s18, 0
    %p291 = por %p289, %p290
    %p292 = scmp.ne.s32.totalorder %s284, %s286
    %p293 = scmp.eq.s32.totalorder %s23, 1
    %p294 = por %p292, %p293
    %p295 = scmp.ne.s32.totalorder %s286, %s287
    %p296 = scmp.eq.s32.totalorder %s23, 0
    %p297 = por %p295, %p296
    %p298 = scmp.ne.s32.totalorder %s286, %s287
    %p299 = scmp.eq.s32.totalorder %s24, 1
    %p300 = por %p298, %p299
    %p302 = scmp.ne.s32.totalorder %s287, %s301
    %p303 = scmp.eq.s32.totalorder %s24, 0
    %p304 = por %p302, %p303
    %s306 = sadd.s32 %s305, 1
    %p309 = scmp.eq.s32.totalorder %s18, 1
    %p310 = scmp.ne.s32.totalorder %s305, %s307
    %p311 = scmp.eq.s32.totalorder %s18, 0
    %p312 = por %p310, %p311
    %p313 = scmp.ne.s32.totalorder %s305, %s307
    %p314 = scmp.eq.s32.totalorder %s23, 1
    %p315 = por %p313, %p314
    %p316 = scmp.ne.s32.totalorder %s307, %s308
    %p317 = scmp.eq.s32.totalorder %s23, 0
    %p318 = por %p316, %p317
    %p319 = scmp.ne.s32.totalorder %s307, %s308
    %p320 = scmp.eq.s32.totalorder %s24, 1
    %p321 = por %p319, %p320
    %p323 = scmp.ne.s32.totalorder %s308, %s322
    %p324 = scmp.eq.s32.totalorder %s24, 0
    %p325 = por %p323, %p324
    %s326 = ssub.s32 %s25, %s44
    %s327 = ssub.s32 %s26, %s40
    %s328 = sor.u32 %s326, %s327
    %p329 = scmp.eq.s32.totalorder %s328, 0
    %s331 = sadd.s32 %s330, 1
    %s332 = scalar_select %p329, %s330, %s331
    %p335 = pneg %p329
    %p336 = scmp.eq.s32.totalorder %s18, 1
    %p337 = por %p335, %p336
    %p338 = scmp.ne.s32.totalorder %s330, %s333
    %p339 = scmp.eq.s32.totalorder %s18, 0
    %p340 = por %p338, %p339
    %p341 = scmp.ne.s32.totalorder %s330, %s333
    %p342 = scmp.eq.s32.totalorder %s23, 1
    %p343 = por %p341, %p342
    %p344 = scmp.ne.s32.totalorder %s333, %s334
    %p345 = scmp.eq.s32.totalorder %s23, 0
    %p346 = por %p344, %p345
    %p347 = scmp.ne.s32.totalorder %s333, %s334
    %p348 = scmp.eq.s32.totalorder %s24, 1
    %p349 = por %p347, %p348
    %p351 = scmp.ne.s32.totalorder %s334, %s350
    %p352 = scmp.eq.s32.totalorder %s24, 0
    %p353 = por %p351, %p352
    %p354 = scmp.le.s32.totalorder 1, %s18
    %p355 = scmp.lt.s32.totalorder %s18, 3
    %p356 = pnand %p354, %p355
    %p357 = pneg %p356
    // Predicated region
    $region9: #{transformer_encoder.8} parent=5 // pred_check
      _
    $region10: #{transformer_encoder.8} parent=5 // pred_check_branch
      %359 = sbr.rel (%p356) target = $region12
    $region11: #{transformer_encoder.8} parent=5 // pred_region
      %s360 = ssub.s32 %s18, 1
      // Predicated region
      $region13: #{transformer_encoder.8} parent=11 // pred_check
        %p361 = pneg %p114
      $region14: #{transformer_encoder.8} parent=11 // pred_check_branch
        %363 = sbr.rel (%p361) target = $region16
      $region15: #{transformer_encoder.8} parent=11 // pred_region
        _
      $region16: #{transformer_encoder.8} parent=11 // pred_fallthru
        _
      // Predicated region
      $region17: #{transformer_encoder.8} parent=11 // pred_check
        %p364 = pneg %p135
      $region18: #{transformer_encoder.8} parent=11 // pred_check_branch
        %366 = sbr.rel (%p364) target = $region20
      $region19: #{transformer_encoder.8} parent=11 // pred_region
        _
      $region20: #{transformer_encoder.8} parent=11 // pred_fallthru
        _
      // Predicated region
      $region21: #{transformer_encoder.8} parent=11 // pred_check
        %p367 = pneg %p161
      $region22: #{transformer_encoder.8} parent=11 // pred_check_branch
        %369 = sbr.rel (%p367) target = $region24
      $region23: #{transformer_encoder.8} parent=11 // pred_region
        %p370 = scmp.lt.s32.totalorder %s30, 0
        %s371 = scalar_select %p370, %s30, 0
        %s372 = smul.addr %s371, 4
        %s373 = scalar_lea.vmem %s4, %s372
      $region24: #{transformer_encoder.8} parent=11 // pred_fallthru
        _
      // Predicated region
      $region25: #{transformer_encoder.8} parent=11 // pred_check
        %p374 = pneg %p187
      $region26: #{transformer_encoder.8} parent=11 // pred_check_branch
        %376 = sbr.rel (%p374) target = $region28
      $region27: #{transformer_encoder.8} parent=11 // pred_region
        %p377 = scmp.lt.s32.totalorder %s30, 0
        %s378 = scalar_select %p377, %s30, 0
        %s379 = scalar_lea.vmem %s5, %s378
      $region28: #{transformer_encoder.8} parent=11 // pred_fallthru
        _
      // Predicated region
      $region29: #{transformer_encoder.8} parent=11 // pred_check
        %p380 = pneg %p213
      $region30: #{transformer_encoder.8} parent=11 // pred_check_branch
        %382 = sbr.rel (%p380) target = $region32
      $region31: #{transformer_encoder.8} parent=11 // pred_region
        %s383 = smul.u32 8, %s30
        %p384 = scmp.lt.s32.totalorder %s383, 7
        %s385 = scalar_select %p384, %s383, 7
        %s386 = smul.addr %s385, 4
        %s387 = scalar_lea.vmem %s6, %s386
        %s388 = smul.u32 8, %s30
      $region32: #{transformer_encoder.8} parent=11 // pred_fallthru
        _
      // Predicated region
      $region33: #{transformer_encoder.8} parent=11 // pred_check
        %p389 = pneg %p234
      $region34: #{transformer_encoder.8} parent=11 // pred_check_branch
        %391 = sbr.rel (%p389) target = $region36
      $region35: #{transformer_encoder.8} parent=11 // pred_region
        _
      $region36: #{transformer_encoder.8} parent=11 // pred_fallthru
        _
      // Predicated region
      $region37: #{transformer_encoder.8} parent=11 // pred_check
        %p392 = pneg %p255
      $region38: #{transformer_encoder.8} parent=11 // pred_check_branch
        %394 = sbr.rel (%p392) target = $region40
      $region39: #{transformer_encoder.8} parent=11 // pred_region
        _
      $region40: #{transformer_encoder.8} parent=11 // pred_fallthru
        _
      // Predicated region
      $region41: #{transformer_encoder.8} parent=11 // pred_check
        %p395 = pneg %p276
      $region42: #{transformer_encoder.8} parent=11 // pred_check_branch
        %397 = sbr.rel (%p395) target = $region44
      $region43: #{transformer_encoder.8} parent=11 // pred_region
        _
      $region44: #{transformer_encoder.8} parent=11 // pred_fallthru
        _
      // Predicated region
      $region45: #{transformer_encoder.8} parent=11 // pred_check
        %p398 = pneg %p297
      $region46: #{transformer_encoder.8} parent=11 // pred_check_branch
        %400 = sbr.rel (%p398) target = $region48
      $region47: #{transformer_encoder.8} parent=11 // pred_region
        _
      $region48: #{transformer_encoder.8} parent=11 // pred_fallthru
        _
      // Predicated region
      $region49: #{transformer_encoder.8} parent=11 // pred_check
        %p401 = pneg %p318
      $region50: #{transformer_encoder.8} parent=11 // pred_check_branch
        %403 = sbr.rel (%p401) target = $region52
      $region51: #{transformer_encoder.8} parent=11 // pred_region
        _
      $region52: #{transformer_encoder.8} parent=11 // pred_fallthru
        _
    $region12: #{transformer_encoder.8} parent=5 // pred_fallthru
      _
    %p404 = scmp.lt.s32.totalorder %s18, 2
    // Predicated region
    $region53: #{transformer_encoder.8} parent=5 // pred_check
      %p405 = pneg %p404
    $region54: #{transformer_encoder.8} parent=5 // pred_check_branch
      %407 = sbr.rel (%p405) target = $region56
    $region55: #{transformer_encoder.8} parent=5 // pred_region
      // Predicated region
      $region57: #{transformer_encoder.8} parent=55 // pred_check
        %p408 = pneg %p59
      $region58: #{transformer_encoder.8} parent=55 // pred_check_branch
        %410 = sbr.rel (%p408) target = $region60
      $region59: #{transformer_encoder.8} parent=55 // pred_region
        %p411 = scmp.lt.s32.totalorder %s25, 1
        %s412 = scalar_select %p411, %s25, 1
        %p413 = scmp.lt.s32.totalorder %s26, 0
        %s414 = scalar_select %p413, %s26, 0
        %s415 = sadd.s32 %s414, %s412
        %s416 = smul.addr %s415, 8
        %s417 = scalar_lea.vmem %s0, %s416
      $region60: #{transformer_encoder.8} parent=55 // pred_fallthru
        _
      // Predicated region
      $region61: #{transformer_encoder.8} parent=55 // pred_check
        %p418 = pneg %p87
      $region62: #{transformer_encoder.8} parent=55 // pred_check_branch
        %420 = sbr.rel (%p418) target = $region64
      $region63: #{transformer_encoder.8} parent=55 // pred_region
        %p421 = scmp.lt.s32.totalorder %s25, 1
        %s422 = scalar_select %p421, %s25, 1
        %p423 = scmp.lt.s32.totalorder %s26, 0
        %s424 = scalar_select %p423, %s26, 0
        %s425 = smul.addr %s422, 4
        %s426 = sadd.s32 %s424, %s425
        %s427 = smul.addr %s426, 4
        %s428 = scalar_lea.vmem %s1, %s427
      $region64: #{transformer_encoder.8} parent=55 // pred_fallthru
        _
    $region56: #{transformer_encoder.8} parent=5 // pred_fallthru
      _
    %p429 = scmp.le.s32.totalorder 1, %s18
    %p430 = scmp.lt.s32.totalorder %s18, 3
    %p431 = pnand %p429, %p430
    %p432 = pneg %p431
    // Predicated region
    $region65: #{transformer_encoder.8} parent=5 // pred_check
      _
    $region66: #{transformer_encoder.8} parent=5 // pred_check_branch
      %434 = sbr.rel (%p431) target = $region68
    $region67: #{transformer_encoder.8} parent=5 // pred_region
      %s435 = ssub.s32 %s18, 1
      %p436 = scmp.lt.s32.totalorder %s28, 1
      %s437 = scalar_select %p436, %s28, 1
      %p438 = scmp.lt.s32.totalorder %s29, 0
      %s439 = scalar_select %p438, %s29, 0
      %s440 = sadd.s32 %s439, %s437
      %s441 = smul.addr %s440, 8
      %s442 = scalar_lea.vmem %s0, %s441
      %p443 = pneg %p65
      %p444 = pneg %p62
      %p445 = scmp.lt.s32.totalorder %s28, 1
      %s446 = scalar_select %p445, %s28, 1
      %p447 = scmp.lt.s32.totalorder %s29, 0
      %s448 = scalar_select %p447, %s29, 0
      %s449 = smul.addr %s446, 4
      %s450 = sadd.s32 %s448, %s449
      %s451 = smul.addr %s450, 4
      %s452 = scalar_lea.vmem %s1, %s451
      %p453 = pneg %p93
      %p454 = pneg %p90
      %p455 = pneg %p114
      %p456 = pneg %p111
      %p457 = pneg %p135
      %p458 = pneg %p132
      %p459 = scmp.lt.s32.totalorder %s30, 0
      %s460 = scalar_select %p459, %s30, 0
      %s461 = smul.addr %s460, 4
      %s462 = scalar_lea.vmem %s4, %s461
      %p463 = pneg %p161
      %p464 = pneg %p158
      %p465 = scmp.lt.s32.totalorder %s30, 0
      %s466 = scalar_select %p465, %s30, 0
      %s467 = scalar_lea.vmem %s5, %s466
      %p468 = pneg %p187
      %p469 = pneg %p184
      %s470 = smul.u32 8, %s30
      %p471 = scmp.lt.s32.totalorder %s470, 7
      %s472 = scalar_select %p471, %s470, 7
      %s473 = smul.addr %s472, 4
      %s474 = scalar_lea.vmem %s6, %s473
      %p475 = pneg %p213
      %p476 = pneg %p210
      %p477 = pneg %p234
      %p478 = pneg %p231
      %p479 = pneg %p255
      %p480 = pneg %p252
      %p481 = pneg %p276
      %p482 = pneg %p273
      %p483 = pneg %p297
      %p484 = pneg %p294
      %p485 = pneg %p318
      %p486 = pneg %p315
      %p487 = pneg %p346
      %p488 = pneg %p343
      %p489 = scmp.lt.s32.totalorder %s28, 1
      %s490 = scalar_select %p489, %s28, 1
      %p491 = scmp.lt.s32.totalorder %s29, 0
      %s492 = scalar_select %p491, %s29, 0
      %s493 = sadd.s32 %s492, %s490
      %s494 = smul.addr %s493, 8
      %s495 = scalar_lea.vmem %s12, %s494
      %p496 = scmp.lt.s32.totalorder %s28, 1
      %s497 = scalar_select %p496, %s28, 1
      %p498 = scmp.lt.s32.totalorder %s29, 0
      %s499 = scalar_select %p498, %s29, 0
      %s500 = sadd.s32 %s499, %s497
      %s501 = smul.addr %s500, 8
      %s502 = scalar_lea.vmem %s0, %s501
      %p503 = scmp.lt.s32.totalorder %s28, 1
      %s504 = scalar_select %p503, %s28, 1
      %p505 = scmp.lt.s32.totalorder %s29, 0
      %s506 = scalar_select %p505, %s29, 0
      %s507 = smul.addr %s504, 4
      %s508 = sadd.s32 %s506, %s507
      %s509 = smul.addr %s508, 4
      %s510 = scalar_lea.vmem %s1, %s509
      %p511 = scmp.lt.s32.totalorder %s30, 0
      %s512 = scalar_select %p511, %s30, 0
      %s513 = smul.addr %s512, 4
      %s514 = scalar_lea.vmem %s4, %s513
      %p515 = scmp.lt.s32.totalorder %s30, 0
      %s516 = scalar_select %p515, %s30, 0
      %s517 = scalar_lea.vmem %s5, %s516
      %s518 = smul.u32 8, %s30
      %p519 = scmp.lt.s32.totalorder %s518, 7
      %s520 = scalar_select %p519, %s518, 7
      %s521 = smul.addr %s520, 4
      %s522 = scalar_lea.vmem %s6, %s521
      %s523 = smul.u32 8, %s30
      %p524 = scmp.lt.s32.totalorder %s28, 1
      %s525 = scalar_select %p524, %s28, 1
      %p526 = scmp.lt.s32.totalorder %s29, 0
      %s527 = scalar_select %p526, %s29, 0
      %s528 = sadd.s32 %s527, %s525
      %s529 = smul.addr %s528, 8
      %s530 = scalar_lea.vmem %s12, %s529
      %p532 = scmp.eq.s32.totalorder %s30, 0
      // Predicated region
      $region69: #{transformer_encoder.8} parent=67 // pred_check
        %p533 = pneg %p532
      $region70: #{transformer_encoder.8} parent=67 // pred_check_branch
        %535 = sbr.rel (%p533) target = $region72
      $region71: #{transformer_encoder.8} parent=67 // pred_region
        %v536 = vld [vmem:[%s502] sm:$0xff]
        %v537 = vld [vmem:[%s510] sm:$0xf]
        %v538 = vld [vmem:[%s510 + $0x4] sm:$0xf]
        %v539 = vld [vmem:[%s510 + $0x8] sm:$0xf]
        %v540 = vld [vmem:[%s510 + $0xc] sm:$0xf]
        %v541 = vld [vmem:[%s2] sm:$0xf]
        %s542 = scalar_lea.vmem %s2, 4
        %v543 = vld [vmem:[%s542] sm:$0xf]
        %vm544 = vcmask 64512
        %v546 = vsel %vm544, %v538, 0
        %vm548 = vcmask 1043456
        %v550 = vsel %vm548, %v543, 0
        %552 = vmatprep.subr.bf16.mxu0 0
        %553 = vmatpush1.bf16.msra.mxu0 0
        %554 = vmatprep.subr.bf16.mxu0 0
        %555 = vmatpush1.bf16.msra.mxu0 0
        %556 = vmatprep.subr.bf16.mxu0 0
        %557 = vmatpush1.bf16.msra.mxu0 0
        %558 = vmatprep.subr.bf16.mxu0 0
        %559 = vmatpush1.bf16.msra.mxu0 0
        %560 = vmatprep.subr.bf16.mxu0 0
        %561 = vmatpush1.bf16.msra.mxu0 0
        %562 = vmatprep.subr.bf16.mxu0 0
        %563 = vmatpush1.bf16.msra.mxu0 0
        %564 = vmatprep.subr.bf16.mxu0 0
        %565 = vmatpush1.bf16.msra.mxu0 0
        %566 = vmatprep.subr.bf16.mxu0 0
        %567 = vmatpush1.bf16.msra.mxu0 %v550
        %568 = vmatprep.subr.bf16.mxu0 0
        %569 = vmatpush2.bf16.msra.mxu0 0
        %570 = vmatprep.subr.bf16.mxu0 0
        %571 = vmatpush2.bf16.msra.mxu0 0
        %572 = vmatprep.subr.bf16.mxu0 0
        %573 = vmatpush2.bf16.msra.mxu0 0
        %574 = vmatprep.subr.bf16.mxu0 0
        %575 = vmatpush2.bf16.msra.mxu0 0
        %576 = vmatprep.subr.bf16.mxu0 0
        %577 = vmatpush2.bf16.msra.mxu0 0
        %578 = vmatprep.subr.bf16.mxu0 0
        %579 = vmatpush2.bf16.msra.mxu0 0
        %580 = vmatprep.subr.bf16.mxu0 0
        %581 = vmatpush2.bf16.msra.mxu0 0
        %582 = vmatprep.subr.bf16.mxu0 0
        %583 = vmatpush2.bf16.msra.mxu0 0
        %584 = vmatprep.mubr.bf16.mxu0 0
        %585 = vmatmul.mubr.bf16.gmra.mxu0 %v546
        %v586 = vpop.f32.mrf.mxu0
        %v587 = vadd.f32 0.0, %v586
        %v588 = vpop.f32.mrf.mxu0
        %v589 = vpop.f32.mrf.mxu0
        %v590 = vpop.f32.mrf.mxu0
        %591 = vdwg.mxu0
        %v593 = vsel %vm544, %v537, 0
        %v596 = vsel %vm548, %v541, 0
        %598 = vmatprep.subr.bf16.mxu0 0
        %599 = vmatpush1.bf16.msra.mxu0 0
        %600 = vmatprep.subr.bf16.mxu0 0
        %601 = vmatpush1.bf16.msra.mxu0 0
        %602 = vmatprep.subr.bf16.mxu0 0
        %603 = vmatpush1.bf16.msra.mxu0 0
        %604 = vmatprep.subr.bf16.mxu0 0
        %605 = vmatpush1.bf16.msra.mxu0 0
        %606 = vmatprep.subr.bf16.mxu0 0
        %607 = vmatpush1.bf16.msra.mxu0 0
        %608 = vmatprep.subr.bf16.mxu0 0
        %609 = vmatpush1.bf16.msra.mxu0 0
        %610 = vmatprep.subr.bf16.mxu0 0
        %611 = vmatpush1.bf16.msra.mxu0 0
        %612 = vmatprep.subr.bf16.mxu0 0
        %613 = vmatpush1.bf16.msra.mxu0 %v596
        %614 = vmatprep.subr.bf16.mxu0 0
        %615 = vmatpush2.bf16.msra.mxu0 0
        %616 = vmatprep.subr.bf16.mxu0 0
        %617 = vmatpush2.bf16.msra.mxu0 0
        %618 = vmatprep.subr.bf16.mxu0 0
        %619 = vmatpush2.bf16.msra.mxu0 0
        %620 = vmatprep.subr.bf16.mxu0 0
        %621 = vmatpush2.bf16.msra.mxu0 0
        %622 = vmatprep.subr.bf16.mxu0 0
        %623 = vmatpush2.bf16.msra.mxu0 0
        %624 = vmatprep.subr.bf16.mxu0 0
        %625 = vmatpush2.bf16.msra.mxu0 0
        %626 = vmatprep.subr.bf16.mxu0 0
        %627 = vmatpush2.bf16.msra.mxu0 0
        %628 = vmatprep.subr.bf16.mxu0 0
        %629 = vmatpush2.bf16.msra.mxu0 0
        %630 = vmatprep.mubr.bf16.mxu0 0
        %631 = vmatmul.mubr.bf16.gmra.mxu0 %v593
        %v632 = vpop.f32.mrf.mxu0
        %v633 = vadd.f32 %v587, %v632
        %v634 = vpop.f32.mrf.mxu0
        %v635 = vpop.f32.mrf.mxu0
        %v636 = vpop.f32.mrf.mxu0
        %637 = vdwg.mxu0
        %s638 = scalar_lea.vmem %s2, 8
        %v639 = vld [vmem:[%s638] sm:$0xf]
        %v641 = vsel %vm544, %v539, 0
        %v644 = vsel %vm548, %v639, 0
        %646 = vmatprep.subr.bf16.mxu0 0
        %647 = vmatpush1.bf16.msra.mxu0 0
        %648 = vmatprep.subr.bf16.mxu0 0
        %649 = vmatpush1.bf16.msra.mxu0 0
        %650 = vmatprep.subr.bf16.mxu0 0
        %651 = vmatpush1.bf16.msra.mxu0 0
        %652 = vmatprep.subr.bf16.mxu0 0
        %653 = vmatpush1.bf16.msra.mxu0 0
        %654 = vmatprep.subr.bf16.mxu0 0
        %655 = vmatpush1.bf16.msra.mxu0 0
        %656 = vmatprep.subr.bf16.mxu0 0
        %657 = vmatpush1.bf16.msra.mxu0 0
        %658 = vmatprep.subr.bf16.mxu0 0
        %659 = vmatpush1.bf16.msra.mxu0 0
        %660 = vmatprep.subr.bf16.mxu0 0
        %661 = vmatpush1.bf16.msra.mxu0 %v644
        %662 = vmatprep.subr.bf16.mxu0 0
        %663 = vmatpush2.bf16.msra.mxu0 0
        %664 = vmatprep.subr.bf16.mxu0 0
        %665 = vmatpush2.bf16.msra.mxu0 0
        %666 = vmatprep.subr.bf16.mxu0 0
        %667 = vmatpush2.bf16.msra.mxu0 0
        %668 = vmatprep.subr.bf16.mxu0 0
        %669 = vmatpush2.bf16.msra.mxu0 0
        %670 = vmatprep.subr.bf16.mxu0 0
        %671 = vmatpush2.bf16.msra.mxu0 0
        %672 = vmatprep.subr.bf16.mxu0 0
        %673 = vmatpush2.bf16.msra.mxu0 0
        %674 = vmatprep.subr.bf16.mxu0 0
        %675 = vmatpush2.bf16.msra.mxu0 0
        %676 = vmatprep.subr.bf16.mxu0 0
        %677 = vmatpush2.bf16.msra.mxu0 0
        %678 = vmatprep.mubr.bf16.mxu0 0
        %679 = vmatmul.mubr.bf16.gmra.mxu0 %v641
        %v680 = vpop.f32.mrf.mxu0
        %v681 = vadd.f32 0.0, %v680
        %v682 = vpop.f32.mrf.mxu0
        %v683 = vpop.f32.mrf.mxu0
        %v684 = vpop.f32.mrf.mxu0
        %685 = vdwg.mxu0
        %v686 = vadd.f32 %v633, %v681
        %s687 = scalar_lea.vmem %s2, 12
        %v688 = vld [vmem:[%s687] sm:$0xf]
        %v690 = vsel %vm544, %v540, 0
        %v693 = vsel %vm548, %v688, 0
        %695 = vmatprep.subr.bf16.mxu0 0
        %696 = vmatpush1.bf16.msra.mxu0 0
        %697 = vmatprep.subr.bf16.mxu0 0
        %698 = vmatpush1.bf16.msra.mxu0 0
        %699 = vmatprep.subr.bf16.mxu0 0
        %700 = vmatpush1.bf16.msra.mxu0 0
        %701 = vmatprep.subr.bf16.mxu0 0
        %702 = vmatpush1.bf16.msra.mxu0 0
        %703 = vmatprep.subr.bf16.mxu0 0
        %704 = vmatpush1.bf16.msra.mxu0 0
        %705 = vmatprep.subr.bf16.mxu0 0
        %706 = vmatpush1.bf16.msra.mxu0 0
        %707 = vmatprep.subr.bf16.mxu0 0
        %708 = vmatpush1.bf16.msra.mxu0 0
        %709 = vmatprep.subr.bf16.mxu0 0
        %710 = vmatpush1.bf16.msra.mxu0 %v693
        %711 = vmatprep.subr.bf16.mxu0 0
        %712 = vmatpush2.bf16.msra.mxu0 0
        %713 = vmatprep.subr.bf16.mxu0 0
        %714 = vmatpush2.bf16.msra.mxu0 0
        %715 = vmatprep.subr.bf16.mxu0 0
        %716 = vmatpush2.bf16.msra.mxu0 0
        %717 = vmatprep.subr.bf16.mxu0 0
        %718 = vmatpush2.bf16.msra.mxu0 0
        %719 = vmatprep.subr.bf16.mxu0 0
        %720 = vmatpush2.bf16.msra.mxu0 0
        %721 = vmatprep.subr.bf16.mxu0 0
        %722 = vmatpush2.bf16.msra.mxu0 0
        %723 = vmatprep.subr.bf16.mxu0 0
        %724 = vmatpush2.bf16.msra.mxu0 0
        %725 = vmatprep.subr.bf16.mxu0 0
        %726 = vmatpush2.bf16.msra.mxu0 0
        %727 = vmatprep.mubr.bf16.mxu0 0
        %728 = vmatmul.mubr.bf16.gmra.mxu0 %v690
        %v729 = vpop.f32.mrf.mxu0
        %v730 = vadd.f32 0.0, %v729
        %v731 = vpop.f32.mrf.mxu0
        %v732 = vpop.f32.mrf.mxu0
        %v733 = vpop.f32.mrf.mxu0
        %734 = vdwg.mxu0
        %v735 = vadd.f32 %v686, %v730
        %v736 = vadd.f32 %v536, %v735
        %v737 = vld [vmem:[%s3] sm:$0x1]
        %v739 = vlaneseq
        %v740 = vshrl.u32 %v739, 7
        %v741 = vsub.s32 0, %v740
        %v742 = vrot.slane %v737, %v741
        %v744 = vadd.f32 %v736, %v742
        %vm745 = vcmask 261120
        %v746 = vsel %vm745, %v744, 0.0
        %747 = vadd.xlane.f32.xlu0 %v746
        %v748 = vpop.xlane.xlu0 %747
        %v749 = vrcp.pop 32.0
        %v750 = vmul.f32 %v748, %v749
        %v751 = vsub.f32 %v744, %v750
        %v752 = vmul.f32 %v751, %v751
        %v753 = vsel %vm745, %v752, 0.0
        %754 = vadd.xlane.f32.xlu0 %v753
        %v755 = vpop.xlane.xlu0 %754
        %v756 = vmul.f32 %v755, %v749
        %v757 = vadd.f32 %v756, 1e-05
        %v758 = vrsqrt.pop %v757
        %v759 = vmul.f32 %v751, %v758
        %v760 = vld [vmem:[%s8] sm:$0x1]
        %v762 = vlaneseq
        %v763 = vshrl.u32 %v762, 7
        %v764 = vsub.s32 0, %v763
        %v765 = vrot.slane %v760, %v764
        %v767 = vmul.f32 %v759, %v765
        %v768 = vld [vmem:[%s9] sm:$0x1]
        %v770 = vlaneseq
        %v771 = vshrl.u32 %v770, 7
        %v772 = vsub.s32 0, %v771
        %v773 = vrot.slane %v768, %v772
        %v775 = vadd.f32 %v767, %v773
        %776 = vst.msk [vmem:[#allocation2] sm:$0xff] %vm745, %v775
        %777 = vst.msk [vmem:[#allocation3] sm:$0xff] %vm745, 0.0
      $region72: #{transformer_encoder.8} parent=67 // pred_fallthru
        _
      %v778 = vld [vmem:[#allocation2] sm:$0xff]
      %v779 = vpack.c.bf16 %v778, %v778
      %v780 = vld [vmem:[%s514] sm:$0xf]
      %v781 = vld [vmem:[%s514 + $0x4] sm:$0xf]
      %v782 = vld [vmem:[%s514 + $0x8] sm:$0xf]
      %v783 = vld [vmem:[%s514 + $0xc] sm:$0xf]
      %v784 = vld [vmem:[%s517] sm:$0x1]
      %v786 = vlaneseq
      %v787 = vshrl.u32 %v786, 7
      %v788 = vsub.s32 0, %v787
      %v789 = vrot.slane %v784, %v788
      %v795 = vunpack.c.l.b16 %v780
      %v796 = vunpack.c.l.b16 %v781
      %v797 = vunpack.c.l.b16 %v782
      %v798 = vunpack.c.l.b16 %v783
      %v799 = vpack.c.b16 %v796, %v795
      %v800 = vpack.c.b16 %v798, %v797
      %vm803 = vcmask 261120
      %v805 = vsel %vm803, %v779, 0
      %807 = vmatprep.subr.bf16.mxu0 0
      %808 = vmatpush1.bf16.msra.mxu0 0
      %809 = vmatprep.subr.bf16.mxu0 0
      %810 = vmatpush1.bf16.msra.mxu0 0
      %811 = vmatprep.subr.bf16.mxu0 0
      %812 = vmatpush1.bf16.msra.mxu0 0
      %813 = vmatprep.subr.bf16.mxu0 0
      %814 = vmatpush1.bf16.msra.mxu0 0
      %815 = vmatprep.subr.bf16.mxu0 0
      %816 = vmatpush1.bf16.msra.mxu0 0
      %817 = vmatprep.subr.bf16.mxu0 0
      %818 = vmatpush1.bf16.msra.mxu0 0
      %819 = vmatprep.subr.bf16.mxu0 0
      %820 = vmatpush1.bf16.msra.mxu0 %v800
      %821 = vmatprep.subr.bf16.mxu0 0
      %822 = vmatpush1.bf16.msra.mxu0 %v799
      %823 = vmatprep.subr.bf16.mxu0 0
      %824 = vmatpush2.bf16.msra.mxu0 0
      %825 = vmatprep.subr.bf16.mxu0 0
      %826 = vmatpush2.bf16.msra.mxu0 0
      %827 = vmatprep.subr.bf16.mxu0 0
      %828 = vmatpush2.bf16.msra.mxu0 0
      %829 = vmatprep.subr.bf16.mxu0 0
      %830 = vmatpush2.bf16.msra.mxu0 0
      %831 = vmatprep.subr.bf16.mxu0 0
      %832 = vmatpush2.bf16.msra.mxu0 0
      %833 = vmatprep.subr.bf16.mxu0 0
      %834 = vmatpush2.bf16.msra.mxu0 0
      %835 = vmatprep.subr.bf16.mxu0 0
      %836 = vmatpush2.bf16.msra.mxu0 0
      %837 = vmatprep.subr.bf16.mxu0 0
      %838 = vmatpush2.bf16.msra.mxu0 0
      %839 = vmatprep.mubr.bf16.mxu0 0
      %840 = vmatmul.mubr.bf16.gmra.mxu0 %v805
      %v841 = vpop.f32.mrf.mxu0
      %v842 = vadd.f32 %v789, %v841
      %v843 = vpop.f32.mrf.mxu0
      %v844 = vpop.f32.mrf.mxu0
      %v845 = vpop.f32.mrf.mxu0
      %846 = vdwg.mxu0
      %v847 = vmax.f32 %v842, 0.0
      %v848 = vld [vmem:[#allocation3] sm:$0xff]
      %v849 = vpack.c.bf16 %v847, %v847
      %v850 = vld [vmem:[%s522] sm:$0xf]
      %v851 = vld [vmem:[%s522 + $0x4] sm:$0xf]
      %v852 = vld [vmem:[%s522 + $0x8] sm:$0xf]
      %v853 = vld [vmem:[%s522 + $0xc] sm:$0xf]
      %v854 = vld [vmem:[%s522 + $0x10] sm:$0xf]
      %v855 = vld [vmem:[%s522 + $0x14] sm:$0xf]
      %v856 = vld [vmem:[%s522 + $0x18] sm:$0xf]
      %v857 = vld [vmem:[%s522 + $0x1c] sm:$0xf]
      %v866 = vunpack.c.l.b16 %v850
      %v867 = vunpack.c.l.b16 %v851
      %v868 = vunpack.c.l.b16 %v852
      %v869 = vunpack.c.l.b16 %v853
      %v870 = vunpack.c.l.b16 %v854
      %v871 = vunpack.c.l.b16 %v855
      %v872 = vunpack.c.l.b16 %v856
      %v873 = vunpack.c.l.b16 %v857
      %v874 = vpack.c.b16 %v867, %v866
      %v875 = vpack.c.b16 %v869, %v868
      %v876 = vpack.c.b16 %v871, %v870
      %v877 = vpack.c.b16 %v873, %v872
      %vm882 = vcmask 523264
      %v884 = vsel %vm882, %v849, 0
      %886 = vmatprep.subr.bf16.mxu0 0
      %887 = vmatpush1.bf16.msra.mxu0 0
      %888 = vmatprep.subr.bf16.mxu0 0
      %889 = vmatpush1.bf16.msra.mxu0 0
      %890 = vmatprep.subr.bf16.mxu0 0
      %891 = vmatpush1.bf16.msra.mxu0 0
      %892 = vmatprep.subr.bf16.mxu0 0
      %893 = vmatpush1.bf16.msra.mxu0 0
      %894 = vmatprep.subr.bf16.mxu0 0
      %895 = vmatpush1.bf16.msra.mxu0 %v877
      %896 = vmatprep.subr.bf16.mxu0 0
      %897 = vmatpush1.bf16.msra.mxu0 %v876
      %898 = vmatprep.subr.bf16.mxu0 0
      %899 = vmatpush1.bf16.msra.mxu0 %v875
      %900 = vmatprep.subr.bf16.mxu0 0
      %901 = vmatpush1.bf16.msra.mxu0 %v874
      %902 = vmatprep.subr.bf16.mxu0 0
      %903 = vmatpush2.bf16.msra.mxu0 0
      %904 = vmatprep.subr.bf16.mxu0 0
      %905 = vmatpush2.bf16.msra.mxu0 0
      %906 = vmatprep.subr.bf16.mxu0 0
      %907 = vmatpush2.bf16.msra.mxu0 0
      %908 = vmatprep.subr.bf16.mxu0 0
      %909 = vmatpush2.bf16.msra.mxu0 0
      %910 = vmatprep.subr.bf16.mxu0 0
      %911 = vmatpush2.bf16.msra.mxu0 0
      %912 = vmatprep.subr.bf16.mxu0 0
      %913 = vmatpush2.bf16.msra.mxu0 0
      %914 = vmatprep.subr.bf16.mxu0 0
      %915 = vmatpush2.bf16.msra.mxu0 0
      %916 = vmatprep.subr.bf16.mxu0 0
      %917 = vmatpush2.bf16.msra.mxu0 0
      %918 = vmatprep.mubr.bf16.mxu0 0
      %919 = vmatmul.mubr.bf16.gmra.mxu0 %v884
      %v920 = vpop.f32.mrf.mxu0
      %v921 = vadd.f32 0.0, %v920
      %v922 = vpop.f32.mrf.mxu0
      %v923 = vpop.f32.mrf.mxu0
      %v924 = vpop.f32.mrf.mxu0
      %925 = vdwg.mxu0
      %v926 = vadd.f32 %v848, %v921
      %927 = vst.msk [vmem:[#allocation3] sm:$0xff] %vm803, %v926
      // Predicated region
      $region73: #{transformer_encoder.8} parent=67 // pred_check
        %p928 = pneg %p532
      $region74: #{transformer_encoder.8} parent=67 // pred_check_branch
        %930 = sbr.rel (%p928) target = $region76
      $region75: #{transformer_encoder.8} parent=67 // pred_region
        %v931 = vld [vmem:[#allocation2] sm:$0xff]
        %v932 = vld [vmem:[#allocation3] sm:$0xff]
        %v933 = vadd.f32 %v931, %v932
        %v934 = vld [vmem:[%s7] sm:$0x1]
        %v936 = vlaneseq
        %v937 = vshrl.u32 %v936, 7
        %v938 = vsub.s32 0, %v937
        %v939 = vrot.slane %v934, %v938
        %v941 = vadd.f32 %v933, %v939
        %v942 = vsel %vm803, %v941, 0.0
        %943 = vadd.xlane.f32.xlu0 %v942
        %v944 = vpop.xlane.xlu0 %943
        %v945 = vrcp.pop 32.0
        %v946 = vmul.f32 %v944, %v945
        %v947 = vsub.f32 %v941, %v946
        %v948 = vmul.f32 %v947, %v947
        %v949 = vsel %vm803, %v948, 0.0
        %950 = vadd.xlane.f32.xlu0 %v949
        %v951 = vpop.xlane.xlu0 %950
        %v952 = vmul.f32 %v951, %v945
        %v953 = vadd.f32 %v952, 1e-05
        %v954 = vrsqrt.pop %v953
        %v955 = vmul.f32 %v947, %v954
        %v956 = vld [vmem:[%s10] sm:$0x1]
        %v958 = vlaneseq
        %v959 = vshrl.u32 %v958, 7
        %v960 = vsub.s32 0, %v959
        %v961 = vrot.slane %v956, %v960
        %v963 = vmul.f32 %v955, %v961
        %v964 = vld [vmem:[%s11] sm:$0x1]
        %v966 = vlaneseq
        %v967 = vshrl.u32 %v966, 7
        %v968 = vsub.s32 0, %v967
        %v969 = vrot.slane %v964, %v968
        %v971 = vadd.f32 %v963, %v969
        %972 = vst.msk [vmem:[%s530] sm:$0xff] %vm803, %v971
      $region76: #{transformer_encoder.8} parent=67 // pred_fallthru
        _
      %p973 = scmp.lt.s32.totalorder %s28, 1
      %s974 = scalar_select %p973, %s28, 1
      %p975 = scmp.lt.s32.totalorder %s29, 0
      %s976 = scalar_select %p975, %s29, 0
      %s977 = sadd.s32 %s976, %s974
      %s978 = smul.addr %s977, 8
      %s979 = scalar_lea.vmem %s12, %s978
      // Predicated region
      $region77: #{transformer_encoder.8} parent=67 // pred_check
        %p980 = pneg %p343
      $region78: #{transformer_encoder.8} parent=67 // pred_check_branch
        %982 = sbr.rel (%p980) target = $region80
      $region79: #{transformer_encoder.8} parent=67 // pred_region
        _
      $region80: #{transformer_encoder.8} parent=67 // pred_fallthru
        _
    $region68: #{transformer_encoder.8} parent=5 // pred_fallthru
      _
    %p983 = scmp.le.s32.totalorder 2, %s18
    // Predicated region
    $region81: #{transformer_encoder.8} parent=5 // pred_check
      %p984 = pneg %p983
    $region82: #{transformer_encoder.8} parent=5 // pred_check_branch
      %986 = sbr.rel (%p984) target = $region84
    $region83: #{transformer_encoder.8} parent=5 // pred_region
      %s987 = ssub.s32 %s18, 2
      // Predicated region
      $region85: #{transformer_encoder.8} parent=83 // pred_check
        %p988 = pneg %p349
      $region86: #{transformer_encoder.8} parent=83 // pred_check_branch
        %990 = sbr.rel (%p988) target = $region88
      $region87: #{transformer_encoder.8} parent=83 // pred_region
        %p991 = scmp.lt.s32.totalorder %s31, 1
        %s992 = scalar_select %p991, %s31, 1
        %p993 = scmp.lt.s32.totalorder %s32, 0
        %s994 = scalar_select %p993, %s32, 0
        %s995 = sadd.s32 %s994, %s992
        %s996 = smul.addr %s995, 8
        %s997 = scalar_lea.vmem %s12, %s996
      $region88: #{transformer_encoder.8} parent=83 // pred_fallthru
        _
    $region84: #{transformer_encoder.8} parent=5 // pred_fallthru
      _
  $region6: #{transformer_encoder.8} parent=0 // loop_footer
    %s22 = sadd.s32 1, %s18
  $region7: #{transformer_encoder.8} parent=0 // loop_footer_branch
    %17 = sbr.rel target = $region3
  $region8: #{transformer_encoder.8} parent=0 // loop_exit
    _

</llo_original>
